<compile_context>
chip_gen: v7x
topology: tpu7x:2x2x1
jax: 0.10.0
libtpu: 0.0.40
codegen_flags: <defaults>
</compile_context>

<pallas_src>
import jax
import jax.numpy as jnp
from jax.experimental import pallas as pl
from jax.experimental.pallas import tpu as pltpu

IN_DIM = 28 * 28        # 784
H1_DIM = 300
H2_DIM = 100
N_CLASSES = 10
N_CLASSES_PAD = 128     # lane-dense padded class dim
TM_MAX = 512            # batch tile: >=256 rows keeps the 256x256 MXU busy


def _round_up(n, m):
    return (n + m - 1) // m * m


def _mlp_softmax_kernel(x_ref, w1_ref, b1_ref, w2_ref, b2_ref, w3_ref, b3_ref,
                        o_ref):
    # ---- Linear(784, 300) + ReLU  (bf16 MXU inputs, f32 accumulate) ----
    h1 = jnp.dot(x_ref[...], w1_ref[...], preferred_element_type=jnp.float32)
    h1 = jnp.maximum(h1 + b1_ref[...], 0.0)

    # ---- Linear(300, 100) + ReLU ----
    h2 = jnp.dot(h1.astype(jnp.bfloat16), w2_ref[...],
                 preferred_element_type=jnp.float32)
    h2 = jnp.maximum(h2 + b2_ref[...], 0.0)

    # ---- Linear(100, 10 [padded to 128]) ----
    logits = jnp.dot(h2.astype(jnp.bfloat16), w3_ref[...],
                     preferred_element_type=jnp.float32)
    logits = logits + b3_ref[...]          # padded cols biased to -1e30

    # ---- softmax over classes (torch dim=1 == last axis here) ----
    m = jnp.max(logits, axis=-1, keepdims=True)
    e = jnp.exp(logits - m)                # padded cols underflow to exactly 0
    denom = jnp.sum(e, axis=-1, keepdims=True)
    r = pl.reciprocal(denom, approx=True)  # EUP vrcp (free slot next to exp)
    r = r * (2.0 - denom * r)              # one Newton step -> ~f32 exact
    o_ref[...] = (e * r).astype(o_ref.dtype)


@jax.jit
def mnist_fc_forward(x_nchw, params):
    """x_nchw: (B, 1, 28, 28) float32. Returns (B, 10) softmax probabilities."""
    w1, b1, w2, b2, w3, b3 = params
    B = x_nchw.shape[0]

    # x.view(-1, 784); bf16 halves the activation DMA and is MXU-native.
    x = x_nchw.reshape(B, IN_DIM).astype(jnp.bfloat16)

    # Batch tiling: TM rows per grid step, batch padded to a multiple of TM.
    TM = min(TM_MAX, _round_up(B, 8))
    B_pad = _round_up(B, TM)
    if B_pad != B:
        x = jnp.pad(x, ((0, B_pad - B), (0, 0)))

    # bf16 weights for the MXU; biases stay f32. Pad class dim 10 -> 128 with
    # zero weight columns and -1e30 bias so padded softmax columns are 0.
    w1b = w1.astype(jnp.bfloat16)
    w2b = w2.astype(jnp.bfloat16)
    w3b = jnp.pad(w3, ((0, 0), (0, N_CLASSES_PAD - N_CLASSES))).astype(
        jnp.bfloat16)
    b3p = jnp.pad(b3, ((0, 0), (0, N_CLASSES_PAD - N_CLASSES)),
                  constant_values=-1e30)

    grid = (B_pad // TM,)

    flops = 2 * B_pad * (IN_DIM * H1_DIM + H1_DIM * H2_DIM
                         + H2_DIM * N_CLASSES_PAD)
    bytes_accessed = (
        B_pad * IN_DIM * 2                                                 # x
        + (IN_DIM * H1_DIM + H1_DIM * H2_DIM + H2_DIM * N_CLASSES_PAD) * 2  # W
        + (H1_DIM + H2_DIM + N_CLASSES_PAD) * 4                            # b
        + B_pad * N_CLASSES_PAD * 4)                                       # out
    cost = pl.CostEstimate(flops=flops,
                           transcendentals=B_pad * (N_CLASSES_PAD + 1),
                           bytes_accessed=bytes_accessed)

    out = pl.pallas_call(
        _mlp_softmax_kernel,
        out_shape=jax.ShapeDtypeStruct((B_pad, N_CLASSES_PAD), jnp.float32),
        grid=grid,
        in_specs=[
            pl.BlockSpec((TM, IN_DIM), lambda i: (i, 0)),              # x tile
            pl.BlockSpec((IN_DIM, H1_DIM), lambda i: (0, 0)),          # w1
            pl.BlockSpec((1, H1_DIM), lambda i: (0, 0)),               # b1
            pl.BlockSpec((H1_DIM, H2_DIM), lambda i: (0, 0)),          # w2
            pl.BlockSpec((1, H2_DIM), lambda i: (0, 0)),               # b2
            pl.BlockSpec((H2_DIM, N_CLASSES_PAD), lambda i: (0, 0)),   # w3 pad
            pl.BlockSpec((1, N_CLASSES_PAD), lambda i: (0, 0)),        # b3 pad
        ],
        out_specs=pl.BlockSpec((TM, N_CLASSES_PAD), lambda i: (i, 0)),
        compiler_params=pltpu.CompilerParams(
            dimension_semantics=("parallel",)),
        cost_estimate=cost,
    )(x, w1b, b1, w2b, b2, w3b, b3p)

    return out[:B, :N_CLASSES]


def init_params(key):
    """Deterministic synthetic params. Shapes mirror nn.Linear layers, but
    weights are stored as (in, out) for x @ W. Biases kept 2D (1, out)."""
    k1, k2, k3, k4, k5, k6 = jax.random.split(key, 6)
    w1 = jax.random.normal(k1, (IN_DIM, H1_DIM), jnp.float32) * 0.05
    b1 = jax.random.normal(k2, (1, H1_DIM), jnp.float32) * 0.01
    w2 = jax.random.normal(k3, (H1_DIM, H2_DIM), jnp.float32) * 0.05
    b2 = jax.random.normal(k4, (1, H2_DIM), jnp.float32) * 0.01
    w3 = jax.random.normal(k5, (H2_DIM, N_CLASSES), jnp.float32) * 0.05
    b3 = jax.random.normal(k6, (1, N_CLASSES), jnp.float32) * 0.01
    return (w1, b1, w2, b2, w3, b3)


def _reference_forward(x_nchw, params):
    """Pure-JAX f32 reference mirroring the PyTorch module."""
    w1, b1, w2, b2, w3, b3 = params
    x = x_nchw.reshape(x_nchw.shape[0], IN_DIM).astype(jnp.float32)
    h1 = jnp.maximum(x @ w1 + b1, 0.0)
    h2 = jnp.maximum(h1 @ w2 + b2, 0.0)
    logits = h2 @ w3 + b3
    return jax.nn.softmax(logits, axis=1)


if __name__ == "__main__":
    key = jax.random.PRNGKey(0)
    pkey, xkey = jax.random.split(key)
    params = init_params(pkey)

    # Small batch of MNIST-shaped inputs, NCHW like PyTorch.
    x = jax.random.normal(xkey, (8, 1, 28, 28), jnp.float32)

    out = jax.block_until_ready(mnist_fc_forward(x, params))

    # Sanity: shape, softmax normalization, and agreement with f32 reference
    # (loose tolerance because the MXU inputs are bf16).
    assert out.shape == (8, N_CLASSES)
    row_sums = jnp.sum(out, axis=1)
    assert jnp.allclose(row_sums, jnp.ones_like(row_sums), atol=1e-4)
    ref = _reference_forward(x, params)
    assert jnp.allclose(out, ref, atol=5e-2)

    print("KERNEL_OK")
</pallas_src>

<mosaic_0001>
module attributes {stable_mosaic.version = 11 : i64} {
  func.func @_mlp_softmax_kernel(%arg0: i32, %arg1: memref<8x784xbf16, #tpu.memory_space<vmem>>, %arg2: memref<784x300xbf16, #tpu.memory_space<vmem>>, %arg3: memref<1x300xf32, #tpu.memory_space<vmem>>, %arg4: memref<300x100xbf16, #tpu.memory_space<vmem>>, %arg5: memref<1x100xf32, #tpu.memory_space<vmem>>, %arg6: memref<100x128xbf16, #tpu.memory_space<vmem>>, %arg7: memref<1x128xf32, #tpu.memory_space<vmem>>, %arg8: memref<8x128xf32, #tpu.memory_space<vmem>>) attributes {dimension_semantics = [#tpu.dimension_semantics<parallel>], iteration_bounds = array<i64: 1>, scalar_prefetch = 0 : i64, scratch_operands = 0 : i64, tpu.core_type = #tpu.core_type<tc>, window_params = [{transform_indices = @transform_0, window_bounds = array<i64: 8, 784>}, {pipeline_mode = #tpu.pipeline_mode<synchronous>, transform_indices = @transform_1, window_bounds = array<i64: 784, 300>}, {pipeline_mode = #tpu.pipeline_mode<synchronous>, transform_indices = @transform_2, window_bounds = array<i64: 1, 300>}, {pipeline_mode = #tpu.pipeline_mode<synchronous>, transform_indices = @transform_3, window_bounds = array<i64: 300, 100>}, {pipeline_mode = #tpu.pipeline_mode<synchronous>, transform_indices = @transform_4, window_bounds = array<i64: 1, 100>}, {pipeline_mode = #tpu.pipeline_mode<synchronous>, transform_indices = @transform_5, window_bounds = array<i64: 100, 128>}, {pipeline_mode = #tpu.pipeline_mode<synchronous>, transform_indices = @transform_6, window_bounds = array<i64: 1, 128>}, {transform_indices = @transform_7, window_bounds = array<i64: 8, 128>}]} {
    %c0 = arith.constant 0 : index
    %c0_0 = arith.constant 0 : index
    %0 = vector.load %arg1[%c0, %c0_0] : memref<8x784xbf16, #tpu.memory_space<vmem>>, vector<8x784xbf16>
    %c0_1 = arith.constant 0 : index
    %c0_2 = arith.constant 0 : index
    %1 = vector.load %arg2[%c0_1, %c0_2] : memref<784x300xbf16, #tpu.memory_space<vmem>>, vector<784x300xbf16>
    %cst = arith.constant dense<0.000000e+00> : vector<8x300xf32>
    %2 = tpu.matmul %0, %1, %cst {dimension_numbers = #tpu.dot_dimension_numbers<[1], [0], [0], [1], [0, 0, 1, 1], [], []>} : vector<8x784xbf16>, vector<784x300xbf16>, vector<8x300xf32> -> vector<8x300xf32>
    %c0_3 = arith.constant 0 : index
    %c0_4 = arith.constant 0 : index
    %3 = vector.load %arg3[%c0_3, %c0_4] : memref<1x300xf32, #tpu.memory_space<vmem>>, vector<1x300xf32>
    %4 = vector.broadcast %3 : vector<1x300xf32> to vector<8x300xf32>
    %5 = arith.addf %2, %4 : vector<8x300xf32>
    %cst_5 = arith.constant 0.000000e+00 : f32
    %6 = vector.broadcast %cst_5 : f32 to vector<8x300xf32>
    %7 = arith.maximumf %5, %6 : vector<8x300xf32>
    %8 = arith.truncf %7 : vector<8x300xf32> to vector<8x300xbf16>
    %c0_6 = arith.constant 0 : index
    %c0_7 = arith.constant 0 : index
    %9 = vector.load %arg4[%c0_6, %c0_7] : memref<300x100xbf16, #tpu.memory_space<vmem>>, vector<300x100xbf16>
    %cst_8 = arith.constant dense<0.000000e+00> : vector<8x100xf32>
    %10 = tpu.matmul %8, %9, %cst_8 {dimension_numbers = #tpu.dot_dimension_numbers<[1], [0], [0], [1], [0, 0, 1, 1], [], []>} : vector<8x300xbf16>, vector<300x100xbf16>, vector<8x100xf32> -> vector<8x100xf32>
    %c0_9 = arith.constant 0 : index
    %c0_10 = arith.constant 0 : index
    %11 = vector.load %arg5[%c0_9, %c0_10] : memref<1x100xf32, #tpu.memory_space<vmem>>, vector<1x100xf32>
    %12 = vector.broadcast %11 : vector<1x100xf32> to vector<8x100xf32>
    %13 = arith.addf %10, %12 : vector<8x100xf32>
    %cst_11 = arith.constant 0.000000e+00 : f32
    %14 = vector.broadcast %cst_11 : f32 to vector<8x100xf32>
    %15 = arith.maximumf %13, %14 : vector<8x100xf32>
    %16 = arith.truncf %15 : vector<8x100xf32> to vector<8x100xbf16>
    %c0_12 = arith.constant 0 : index
    %c0_13 = arith.constant 0 : index
    %17 = vector.load %arg6[%c0_12, %c0_13] : memref<100x128xbf16, #tpu.memory_space<vmem>>, vector<100x128xbf16>
    %cst_14 = arith.constant dense<0.000000e+00> : vector<8x128xf32>
    %18 = tpu.matmul %16, %17, %cst_14 {dimension_numbers = #tpu.dot_dimension_numbers<[1], [0], [0], [1], [0, 0, 1, 1], [], []>} : vector<8x100xbf16>, vector<100x128xbf16>, vector<8x128xf32> -> vector<8x128xf32>
    %c0_15 = arith.constant 0 : index
    %c0_16 = arith.constant 0 : index
    %19 = vector.load %arg7[%c0_15, %c0_16] : memref<1x128xf32, #tpu.memory_space<vmem>>, vector<1x128xf32>
    %20 = vector.broadcast %19 : vector<1x128xf32> to vector<8x128xf32>
    %21 = arith.addf %18, %20 : vector<8x128xf32>
    %cst_17 = arith.constant dense<0xFF800000> : vector<8xf32>
    %22 = vector.multi_reduction <maximumf>, %21, %cst_17 [1] : vector<8x128xf32> to vector<8xf32>
    %23 = vector.shape_cast %22 : vector<8xf32> to vector<8x1xf32>
    %24 = vector.broadcast %23 : vector<8x1xf32> to vector<8x128xf32>
    %25 = arith.subf %21, %24 : vector<8x128xf32>
    %26 = math.exp %25 : vector<8x128xf32>
    %cst_18 = arith.constant dense<0.000000e+00> : vector<8xf32>
    %27 = vector.multi_reduction <add>, %26, %cst_18 [1] : vector<8x128xf32> to vector<8xf32>
    %28 = vector.shape_cast %27 : vector<8xf32> to vector<8x1xf32>
    %29 = tpu.reciprocal %28 {approx = true} : vector<8x1xf32> -> vector<8x1xf32>
    %30 = arith.mulf %28, %29 : vector<8x1xf32>
    %cst_19 = arith.constant 2.000000e+00 : f32
    %31 = vector.broadcast %cst_19 : f32 to vector<8x1xf32>
    %32 = arith.subf %31, %30 : vector<8x1xf32>
    %33 = arith.mulf %29, %32 : vector<8x1xf32>
    %34 = vector.broadcast %33 : vector<8x1xf32> to vector<8x128xf32>
    %35 = arith.mulf %26, %34 : vector<8x128xf32>
    %c0_20 = arith.constant 0 : index
    %c0_21 = arith.constant 0 : index
    %36 = vector.load %arg8[%c0_20, %c0_21] : memref<8x128xf32, #tpu.memory_space<vmem>>, vector<8x128xf32>
    tpu.vector_store %arg8[%c0_20, %c0_21], %35 {strides = array<i32>} : memref<8x128xf32, #tpu.memory_space<vmem>>, vector<8x128xf32>,
    return
  }
  func.func @transform_0(%arg0: i32) -> (i32, i32) {
    %c0_i32 = arith.constant 0 : i32
    %c0_i32_0 = arith.constant 0 : i32
    return %arg0, %c0_i32 : i32, i32
  }
  func.func @transform_1(%arg0: i32) -> (i32, i32) {
    %c0_i32 = arith.constant 0 : i32
    %c0_i32_0 = arith.constant 0 : i32
    %c0_i32_1 = arith.constant 0 : i32
    return %c0_i32, %c0_i32_0 : i32, i32
  }
  func.func @transform_2(%arg0: i32) -> (i32, i32) {
    %c0_i32 = arith.constant 0 : i32
    %c0_i32_0 = arith.constant 0 : i32
    %c0_i32_1 = arith.constant 0 : i32
    return %c0_i32, %c0_i32_0 : i32, i32
  }
  func.func @transform_3(%arg0: i32) -> (i32, i32) {
    %c0_i32 = arith.constant 0 : i32
    %c0_i32_0 = arith.constant 0 : i32
    %c0_i32_1 = arith.constant 0 : i32
    return %c0_i32, %c0_i32_0 : i32, i32
  }
  func.func @transform_4(%arg0: i32) -> (i32, i32) {
    %c0_i32 = arith.constant 0 : i32
    %c0_i32_0 = arith.constant 0 : i32
    %c0_i32_1 = arith.constant 0 : i32
    return %c0_i32, %c0_i32_0 : i32, i32
  }
  func.func @transform_5(%arg0: i32) -> (i32, i32) {
    %c0_i32 = arith.constant 0 : i32
    %c0_i32_0 = arith.constant 0 : i32
    %c0_i32_1 = arith.constant 0 : i32
    return %c0_i32, %c0_i32_0 : i32, i32
  }
  func.func @transform_6(%arg0: i32) -> (i32, i32) {
    %c0_i32 = arith.constant 0 : i32
    %c0_i32_0 = arith.constant 0 : i32
    %c0_i32_1 = arith.constant 0 : i32
    return %c0_i32, %c0_i32_0 : i32, i32
  }
  func.func @transform_7(%arg0: i32) -> (i32, i32) {
    %c0_i32 = arith.constant 0 : i32
    %c0_i32_0 = arith.constant 0 : i32
    return %arg0, %c0_i32 : i32, i32
  }
}

</mosaic_0001>

<llo_original>
// kernel: mnist_fc_forward.1
$region0: #{mnist_fc_forward.1}
  #allocation0 [shape = 'u32[]', space=smem, size = 0x4, offset = 0x4, fixed_abs, tag = 'smem constant byte address 0x4 - core index']
  #allocation1 [shape = 'u32[144,128]{1,0:T(1,128)}', space=vmem, size = 0x12000, scoped, tag = 'internal scratch']
  %s0 = inlined_call_operand.vmem [shape: bf16[8,784], index: 0, kind: input, shape index: {}]
  %s1 = inlined_call_operand.vmem [shape: bf16[784,300], index: 1, kind: input, shape index: {}]
  %s2 = inlined_call_operand.vmem [shape: f32[1,300], index: 2, kind: input, shape index: {}]
  %s3 = inlined_call_operand.vmem [shape: bf16[300,100], index: 3, kind: input, shape index: {}]
  %s4 = inlined_call_operand.vmem [shape: f32[1,100], index: 4, kind: input, shape index: {}]
  %s5 = inlined_call_operand.vmem [shape: bf16[100,128], index: 5, kind: input, shape index: {}]
  %s6 = inlined_call_operand.vmem [shape: f32[1,128], index: 6, kind: input, shape index: {}]
  %s7 = inlined_call_operand.hbm [shape: f32[8,128], index: 7, kind: output, shape index: {}]
  %s8 = sld [smem:[#allocation0]]
  $region38: #{mnist_fc_forward.1} parent=0
    _
  %s10 = ssub.s32 1, %s8
  %s11 = scalar_select 0, %s10, %s8
  $region1: #{mnist_fc_forward.1} parent=0
    #allocation2 [shape = 'u8[4096]{0}', space=vmem, size = 0x1000, scoped, tag = 'output window, operand 0, single buffered']
    #allocation3 [shape = 's32[1]{0}', space=sflag, size = 0x4, scoped, tag = 'scoped memory for mnist_fc_forward.1']
    %12 = vsyncpa [#allocation3], 0
    // Predicated region
    $region2: #{mnist_fc_forward.1} parent=1 // pred_check
      _
    $region3: #{mnist_fc_forward.1} parent=1 // pred_check_branch
      %14 = sbr.rel (0) target = $region5
    $region4: #{mnist_fc_forward.1} parent=1 // pred_region
      _
    $region5: #{mnist_fc_forward.1} parent=1 // pred_fallthru
      _
    // Predicated region
    $region6: #{mnist_fc_forward.1} parent=1 // pred_check
      _
    $region7: #{mnist_fc_forward.1} parent=1 // pred_check_branch
      %16 = sbr.rel (0) target = $region9
    $region8: #{mnist_fc_forward.1} parent=1 // pred_region
      _
    $region9: #{mnist_fc_forward.1} parent=1 // pred_fallthru
      _
    // Predicated region
    $region10: #{mnist_fc_forward.1} parent=1 // pred_check
      _
    $region11: #{mnist_fc_forward.1} parent=1 // pred_check_branch
      %18 = sbr.rel (0) target = $region13
    $region12: #{mnist_fc_forward.1} parent=1 // pred_region
      _
    $region13: #{mnist_fc_forward.1} parent=1 // pred_fallthru
      _
    // Predicated region
    $region14: #{mnist_fc_forward.1} parent=1 // pred_check
      _
    $region15: #{mnist_fc_forward.1} parent=1 // pred_check_branch
      %20 = sbr.rel (0) target = $region17
    $region16: #{mnist_fc_forward.1} parent=1 // pred_region
      _
    $region17: #{mnist_fc_forward.1} parent=1 // pred_fallthru
      _
    // Predicated region
    $region18: #{mnist_fc_forward.1} parent=1 // pred_check
      _
    $region19: #{mnist_fc_forward.1} parent=1 // pred_check_branch
      %22 = sbr.rel (0) target = $region21
    $region20: #{mnist_fc_forward.1} parent=1 // pred_region
      _
    $region21: #{mnist_fc_forward.1} parent=1 // pred_fallthru
      _
    // Predicated region
    $region22: #{mnist_fc_forward.1} parent=1 // pred_check
      _
    $region23: #{mnist_fc_forward.1} parent=1 // pred_check_branch
      %24 = sbr.rel (0) target = $region25
    $region24: #{mnist_fc_forward.1} parent=1 // pred_region
      _
    $region25: #{mnist_fc_forward.1} parent=1 // pred_fallthru
      _
    // Predicated region
    $region26: #{mnist_fc_forward.1} parent=1 // pred_check
      _
    $region27: #{mnist_fc_forward.1} parent=1 // pred_check_branch
      %26 = sbr.rel (0) target = $region29
    $region28: #{mnist_fc_forward.1} parent=1 // pred_region
      _
    $region29: #{mnist_fc_forward.1} parent=1 // pred_fallthru
      _
    %v28 = vld [vmem:[%s0] sm:$0xff]
    %v29 = vld [vmem:[%s0 + $0x8] sm:$0xff]
    %v30 = vld [vmem:[%s0 + $0x10] sm:$0xff]
    %v31 = vld [vmem:[%s0 + $0x18] sm:$0xf]
    %v32 = vld [vmem:[%s1] sm:$0xff]
    %v33 = vld [vmem:[%s1 + $0x8] sm:$0xf]
    %v34 = vld [vmem:[%s1 + $0xc] sm:$0xff]
    %v35 = vld [vmem:[%s1 + $0x14] sm:$0xf]
    %v36 = vld [vmem:[%s1 + $0x18] sm:$0xff]
    %v37 = vld [vmem:[%s1 + $0x20] sm:$0xf]
    %v38 = vld [vmem:[%s1 + $0x24] sm:$0xff]
    %v39 = vld [vmem:[%s1 + $0x2c] sm:$0xf]
    %v40 = vld [vmem:[%s1 + $0x30] sm:$0xff]
    %v41 = vld [vmem:[%s1 + $0x38] sm:$0xf]
    %v42 = vld [vmem:[%s1 + $0x3c] sm:$0xff]
    %v43 = vld [vmem:[%s1 + $0x44] sm:$0xf]
    %v44 = vld [vmem:[%s1 + $0x48] sm:$0xff]
    %v45 = vld [vmem:[%s1 + $0x50] sm:$0xf]
    %v46 = vld [vmem:[%s1 + $0x54] sm:$0xff]
    %v47 = vld [vmem:[%s1 + $0x5c] sm:$0xf]
    %v48 = vld [vmem:[%s1 + $0x60] sm:$0xff]
    %v49 = vld [vmem:[%s1 + $0x68] sm:$0xf]
    %v50 = vld [vmem:[%s1 + $0x6c] sm:$0xff]
    %v51 = vld [vmem:[%s1 + $0x74] sm:$0xf]
    %v52 = vld [vmem:[%s1 + $0x78] sm:$0xff]
    %v53 = vld [vmem:[%s1 + $0x80] sm:$0xf]
    %v54 = vld [vmem:[%s1 + $0x84] sm:$0xff]
    %v55 = vld [vmem:[%s1 + $0x8c] sm:$0xf]
    %v56 = vld [vmem:[%s1 + $0x90] sm:$0xff]
    %v57 = vld [vmem:[%s1 + $0x98] sm:$0xf]
    %v58 = vld [vmem:[%s1 + $0x9c] sm:$0xff]
    %v59 = vld [vmem:[%s1 + $0xa4] sm:$0xf]
    %v60 = vld [vmem:[%s1 + $0xa8] sm:$0xff]
    %v61 = vld [vmem:[%s1 + $0xb0] sm:$0xf]
    %v62 = vld [vmem:[%s1 + $0xb4] sm:$0xff]
    %v63 = vld [vmem:[%s1 + $0xbc] sm:$0xf]
    %v64 = vld [vmem:[%s1 + $0xc0] sm:$0xff]
    %v65 = vld [vmem:[%s1 + $0xc8] sm:$0xf]
    %v66 = vld [vmem:[%s1 + $0xcc] sm:$0xff]
    %v67 = vld [vmem:[%s1 + $0xd4] sm:$0xf]
    %v68 = vld [vmem:[%s1 + $0xd8] sm:$0xff]
    %v69 = vld [vmem:[%s1 + $0xe0] sm:$0xf]
    %v70 = vld [vmem:[%s1 + $0xe4] sm:$0xff]
    %v71 = vld [vmem:[%s1 + $0xec] sm:$0xf]
    %v72 = vld [vmem:[%s1 + $0xf0] sm:$0xff]
    %v73 = vld [vmem:[%s1 + $0xf8] sm:$0xf]
    %v74 = vld [vmem:[%s1 + $0xfc] sm:$0xff]
    %v75 = vld [vmem:[%s1 + $0x104] sm:$0xf]
    %v76 = vld [vmem:[%s1 + $0x108] sm:$0xff]
    %v77 = vld [vmem:[%s1 + $0x110] sm:$0xf]
    %v78 = vld [vmem:[%s1 + $0x114] sm:$0xff]
    %v79 = vld [vmem:[%s1 + $0x11c] sm:$0xf]
    %v80 = vld [vmem:[%s1 + $0x120] sm:$0xff]
    %v81 = vld [vmem:[%s1 + $0x128] sm:$0xf]
    %v82 = vld [vmem:[%s1 + $0x12c] sm:$0xff]
    %v83 = vld [vmem:[%s1 + $0x134] sm:$0xf]
    %v84 = vld [vmem:[%s1 + $0x138] sm:$0xff]
    %v85 = vld [vmem:[%s1 + $0x140] sm:$0xf]
    %v86 = vld [vmem:[%s1 + $0x144] sm:$0xff]
    %v87 = vld [vmem:[%s1 + $0x14c] sm:$0xf]
    %v88 = vld [vmem:[%s1 + $0x150] sm:$0xff]
    %v89 = vld [vmem:[%s1 + $0x158] sm:$0xf]
    %v90 = vld [vmem:[%s1 + $0x15c] sm:$0xff]
    %v91 = vld [vmem:[%s1 + $0x164] sm:$0xf]
    %v92 = vld [vmem:[%s1 + $0x168] sm:$0xff]
    %v93 = vld [vmem:[%s1 + $0x170] sm:$0xf]
    %v94 = vld [vmem:[%s1 + $0x174] sm:$0xff]
    %v95 = vld [vmem:[%s1 + $0x17c] sm:$0xf]
    %v96 = vld [vmem:[%s1 + $0x180] sm:$0xff]
    %v97 = vld [vmem:[%s1 + $0x188] sm:$0xf]
    %v98 = vld [vmem:[%s1 + $0x18c] sm:$0xff]
    %v99 = vld [vmem:[%s1 + $0x194] sm:$0xf]
    %v100 = vld [vmem:[%s1 + $0x198] sm:$0xff]
    %v101 = vld [vmem:[%s1 + $0x1a0] sm:$0xf]
    %v102 = vld [vmem:[%s1 + $0x1a4] sm:$0xff]
    %v103 = vld [vmem:[%s1 + $0x1ac] sm:$0xf]
    %v104 = vld [vmem:[%s1 + $0x1b0] sm:$0xff]
    %v105 = vld [vmem:[%s1 + $0x1b8] sm:$0xf]
    %v106 = vld [vmem:[%s1 + $0x1bc] sm:$0xff]
    %v107 = vld [vmem:[%s1 + $0x1c4] sm:$0xf]
    %v108 = vld [vmem:[%s1 + $0x1c8] sm:$0xff]
    %v109 = vld [vmem:[%s1 + $0x1d0] sm:$0xf]
    %v110 = vld [vmem:[%s1 + $0x1d4] sm:$0xff]
    %v111 = vld [vmem:[%s1 + $0x1dc] sm:$0xf]
    %v112 = vld [vmem:[%s1 + $0x1e0] sm:$0xff]
    %v113 = vld [vmem:[%s1 + $0x1e8] sm:$0xf]
    %v114 = vld [vmem:[%s1 + $0x1ec] sm:$0xff]
    %v115 = vld [vmem:[%s1 + $0x1f4] sm:$0xf]
    %v116 = vld [vmem:[%s1 + $0x1f8] sm:$0xff]
    %v117 = vld [vmem:[%s1 + $0x200] sm:$0xf]
    %v118 = vld [vmem:[%s1 + $0x204] sm:$0xff]
    %v119 = vld [vmem:[%s1 + $0x20c] sm:$0xf]
    %v120 = vld [vmem:[%s1 + $0x210] sm:$0xff]
    %v121 = vld [vmem:[%s1 + $0x218] sm:$0xf]
    %v122 = vld [vmem:[%s1 + $0x21c] sm:$0xff]
    %v123 = vld [vmem:[%s1 + $0x224] sm:$0xf]
    %v124 = vld [vmem:[%s1 + $0x228] sm:$0xff]
    %v125 = vld [vmem:[%s1 + $0x230] sm:$0xf]
    %v126 = vld [vmem:[%s1 + $0x234] sm:$0xff]
    %v127 = vld [vmem:[%s1 + $0x23c] sm:$0xf]
    %v128 = vld [vmem:[%s1 + $0x240] sm:$0xff]
    %v129 = vld [vmem:[%s1 + $0x248] sm:$0xf]
    %v130 = vld [vmem:[%s1 + $0x24c] sm:$0xff]
    %v131 = vld [vmem:[%s1 + $0x254] sm:$0xf]
    %v132 = vld [vmem:[%s1 + $0x258] sm:$0xff]
    %v133 = vld [vmem:[%s1 + $0x260] sm:$0xf]
    %v134 = vld [vmem:[%s1 + $0x264] sm:$0xff]
    %v135 = vld [vmem:[%s1 + $0x26c] sm:$0xf]
    %v136 = vld [vmem:[%s1 + $0x270] sm:$0xff]
    %v137 = vld [vmem:[%s1 + $0x278] sm:$0xf]
    %v138 = vld [vmem:[%s1 + $0x27c] sm:$0xff]
    %v139 = vld [vmem:[%s1 + $0x284] sm:$0xf]
    %v140 = vld [vmem:[%s1 + $0x288] sm:$0xff]
    %v141 = vld [vmem:[%s1 + $0x290] sm:$0xf]
    %v142 = vld [vmem:[%s1 + $0x294] sm:$0xff]
    %v143 = vld [vmem:[%s1 + $0x29c] sm:$0xf]
    %v144 = vld [vmem:[%s1 + $0x2a0] sm:$0xff]
    %v145 = vld [vmem:[%s1 + $0x2a8] sm:$0xf]
    %v146 = vld [vmem:[%s1 + $0x2ac] sm:$0xff]
    %v147 = vld [vmem:[%s1 + $0x2b4] sm:$0xf]
    %v148 = vld [vmem:[%s1 + $0x2b8] sm:$0xff]
    %v149 = vld [vmem:[%s1 + $0x2c0] sm:$0xf]
    %v150 = vld [vmem:[%s1 + $0x2c4] sm:$0xff]
    %v151 = vld [vmem:[%s1 + $0x2cc] sm:$0xf]
    %v152 = vld [vmem:[%s1 + $0x2d0] sm:$0xff]
    %v153 = vld [vmem:[%s1 + $0x2d8] sm:$0xf]
    %v154 = vld [vmem:[%s1 + $0x2dc] sm:$0xff]
    %v155 = vld [vmem:[%s1 + $0x2e4] sm:$0xf]
    %v156 = vld [vmem:[%s1 + $0x2e8] sm:$0xff]
    %v157 = vld [vmem:[%s1 + $0x2f0] sm:$0xf]
    %v158 = vld [vmem:[%s1 + $0x2f4] sm:$0xff]
    %v159 = vld [vmem:[%s1 + $0x2fc] sm:$0xf]
    %v160 = vld [vmem:[%s1 + $0x300] sm:$0xff]
    %v161 = vld [vmem:[%s1 + $0x308] sm:$0xf]
    %v162 = vld [vmem:[%s1 + $0x30c] sm:$0xff]
    %v163 = vld [vmem:[%s1 + $0x314] sm:$0xf]
    %v164 = vld [vmem:[%s1 + $0x318] sm:$0xff]
    %v165 = vld [vmem:[%s1 + $0x320] sm:$0xf]
    %v166 = vld [vmem:[%s1 + $0x324] sm:$0xff]
    %v167 = vld [vmem:[%s1 + $0x32c] sm:$0xf]
    %v168 = vld [vmem:[%s1 + $0x330] sm:$0xff]
    %v169 = vld [vmem:[%s1 + $0x338] sm:$0xf]
    %v170 = vld [vmem:[%s1 + $0x33c] sm:$0xff]
    %v171 = vld [vmem:[%s1 + $0x344] sm:$0xf]
    %v172 = vld [vmem:[%s1 + $0x348] sm:$0xff]
    %v173 = vld [vmem:[%s1 + $0x350] sm:$0xf]
    %v174 = vld [vmem:[%s1 + $0x354] sm:$0xff]
    %v175 = vld [vmem:[%s1 + $0x35c] sm:$0xf]
    %v176 = vld [vmem:[%s1 + $0x360] sm:$0xff]
    %v177 = vld [vmem:[%s1 + $0x368] sm:$0xf]
    %v178 = vld [vmem:[%s1 + $0x36c] sm:$0xff]
    %v179 = vld [vmem:[%s1 + $0x374] sm:$0xf]
    %v180 = vld [vmem:[%s1 + $0x378] sm:$0xff]
    %v181 = vld [vmem:[%s1 + $0x380] sm:$0xf]
    %v182 = vld [vmem:[%s1 + $0x384] sm:$0xff]
    %v183 = vld [vmem:[%s1 + $0x38c] sm:$0xf]
    %v184 = vld [vmem:[%s1 + $0x390] sm:$0xff]
    %v185 = vld [vmem:[%s1 + $0x398] sm:$0xf]
    %v186 = vld [vmem:[%s1 + $0x39c] sm:$0xff]
    %v187 = vld [vmem:[%s1 + $0x3a4] sm:$0xf]
    %v188 = vld [vmem:[%s1 + $0x3a8] sm:$0xff]
    %v189 = vld [vmem:[%s1 + $0x3b0] sm:$0xf]
    %v190 = vld [vmem:[%s1 + $0x3b4] sm:$0xff]
    %v191 = vld [vmem:[%s1 + $0x3bc] sm:$0xf]
    %v192 = vld [vmem:[%s1 + $0x3c0] sm:$0xff]
    %v193 = vld [vmem:[%s1 + $0x3c8] sm:$0xf]
    %v194 = vld [vmem:[%s1 + $0x3cc] sm:$0xff]
    %v195 = vld [vmem:[%s1 + $0x3d4] sm:$0xf]
    %v196 = vld [vmem:[%s1 + $0x3d8] sm:$0xff]
    %v197 = vld [vmem:[%s1 + $0x3e0] sm:$0xf]
    %v198 = vld [vmem:[%s1 + $0x3e4] sm:$0xff]
    %v199 = vld [vmem:[%s1 + $0x3ec] sm:$0xf]
    %v200 = vld [vmem:[%s1 + $0x3f0] sm:$0xff]
    %v201 = vld [vmem:[%s1 + $0x3f8] sm:$0xf]
    %v202 = vld [vmem:[%s1 + $0x3fc] sm:$0xff]
    %v203 = vld [vmem:[%s1 + $0x404] sm:$0xf]
    %v204 = vld [vmem:[%s1 + $0x408] sm:$0xff]
    %v205 = vld [vmem:[%s1 + $0x410] sm:$0xf]
    %v206 = vld [vmem:[%s1 + $0x414] sm:$0xff]
    %v207 = vld [vmem:[%s1 + $0x41c] sm:$0xf]
    %v208 = vld [vmem:[%s1 + $0x420] sm:$0xff]
    %v209 = vld [vmem:[%s1 + $0x428] sm:$0xf]
    %v210 = vld [vmem:[%s1 + $0x42c] sm:$0xff]
    %v211 = vld [vmem:[%s1 + $0x434] sm:$0xf]
    %v212 = vld [vmem:[%s1 + $0x438] sm:$0xff]
    %v213 = vld [vmem:[%s1 + $0x440] sm:$0xf]
    %v214 = vld [vmem:[%s1 + $0x444] sm:$0xff]
    %v215 = vld [vmem:[%s1 + $0x44c] sm:$0xf]
    %v216 = vld [vmem:[%s1 + $0x450] sm:$0xff]
    %v217 = vld [vmem:[%s1 + $0x458] sm:$0xf]
    %v218 = vld [vmem:[%s1 + $0x45c] sm:$0xff]
    %v219 = vld [vmem:[%s1 + $0x464] sm:$0xf]
    %v220 = vld [vmem:[%s1 + $0x468] sm:$0xff]
    %v221 = vld [vmem:[%s1 + $0x470] sm:$0xf]
    %v222 = vld [vmem:[%s1 + $0x474] sm:$0xff]
    %v223 = vld [vmem:[%s1 + $0x47c] sm:$0xf]
    %v224 = vld [vmem:[%s1 + $0x480] sm:$0xff]
    %v225 = vld [vmem:[%s1 + $0x488] sm:$0xf]
    %v226 = vld [vmem:[%s1 + $0x48c] sm:$0xff]
    %v227 = vld [vmem:[%s1 + $0x494] sm:$0xf]
    %v228 = vld [vmem:[%s2] sm:$0x7]
    %v230 = vlaneseq
    %v231 = vshrl.u32 %v230, 7
    %v232 = vsub.s32 0, %v231
    %v233 = vrot.slane %v228, %v232
    %v234 = vlaneseq
    %v235 = vshrl.u32 %v234, 7
    %v236 = vsub.s32 1, %v235
    %v237 = vrot.slane %v228, %v236
    %v238 = vlaneseq
    %v239 = vshrl.u32 %v238, 7
    %v240 = vsub.s32 2, %v239
    %v241 = vrot.slane %v228, %v240
    %v249 = vunpack.c.l.b16 %v28
    %v250 = vunpack.c.h.b16 %v28
    %v251 = vunpack.c.l.b16 %v29
    %v252 = vunpack.c.h.b16 %v29
    %v253 = vunpack.c.l.b16 %v30
    %v254 = vunpack.c.h.b16 %v30
    %v255 = vunpack.c.l.b16 %v31
    %v256 = vpack.c.b16 %v249, %v249
    %v257 = vpack.c.b16 %v250, %v250
    %v258 = vpack.c.b16 %v251, %v251
    %v259 = vpack.c.b16 %v252, %v252
    %v260 = vpack.c.b16 %v253, %v253
    %v261 = vpack.c.b16 %v254, %v254
    %v262 = vpack.c.b16 %v255, %v255
    %v465 = vunpack.c.l.b16 %v32
    %v466 = vunpack.c.h.b16 %v32
    %v467 = vunpack.c.l.b16 %v33
    %v468 = vunpack.c.l.b16 %v34
    %v469 = vunpack.c.h.b16 %v34
    %v470 = vunpack.c.l.b16 %v35
    %v471 = vunpack.c.l.b16 %v36
    %v472 = vunpack.c.h.b16 %v36
    %v473 = vunpack.c.l.b16 %v37
    %v474 = vunpack.c.l.b16 %v38
    %v475 = vunpack.c.h.b16 %v38
    %v476 = vunpack.c.l.b16 %v39
    %v477 = vunpack.c.l.b16 %v40
    %v478 = vunpack.c.h.b16 %v40
    %v479 = vunpack.c.l.b16 %v41
    %v480 = vunpack.c.l.b16 %v42
    %v481 = vunpack.c.h.b16 %v42
    %v482 = vunpack.c.l.b16 %v43
    %v483 = vunpack.c.l.b16 %v44
    %v484 = vunpack.c.h.b16 %v44
    %v485 = vunpack.c.l.b16 %v45
    %v486 = vunpack.c.l.b16 %v46
    %v487 = vunpack.c.h.b16 %v46
    %v488 = vunpack.c.l.b16 %v47
    %v489 = vunpack.c.l.b16 %v48
    %v490 = vunpack.c.h.b16 %v48
    %v491 = vunpack.c.l.b16 %v49
    %v492 = vunpack.c.l.b16 %v50
    %v493 = vunpack.c.h.b16 %v50
    %v494 = vunpack.c.l.b16 %v51
    %v495 = vunpack.c.l.b16 %v52
    %v496 = vunpack.c.h.b16 %v52
    %v497 = vunpack.c.l.b16 %v53
    %v498 = vunpack.c.l.b16 %v54
    %v499 = vunpack.c.h.b16 %v54
    %v500 = vunpack.c.l.b16 %v55
    %v501 = vunpack.c.l.b16 %v56
    %v502 = vunpack.c.h.b16 %v56
    %v503 = vunpack.c.l.b16 %v57
    %v504 = vunpack.c.l.b16 %v58
    %v505 = vunpack.c.h.b16 %v58
    %v506 = vunpack.c.l.b16 %v59
    %v507 = vunpack.c.l.b16 %v60
    %v508 = vunpack.c.h.b16 %v60
    %v509 = vunpack.c.l.b16 %v61
    %v510 = vunpack.c.l.b16 %v62
    %v511 = vunpack.c.h.b16 %v62
    %v512 = vunpack.c.l.b16 %v63
    %v513 = vunpack.c.l.b16 %v64
    %v514 = vunpack.c.h.b16 %v64
    %v515 = vunpack.c.l.b16 %v65
    %v516 = vunpack.c.l.b16 %v66
    %v517 = vunpack.c.h.b16 %v66
    %v518 = vunpack.c.l.b16 %v67
    %v519 = vunpack.c.l.b16 %v68
    %v520 = vunpack.c.h.b16 %v68
    %v521 = vunpack.c.l.b16 %v69
    %v522 = vunpack.c.l.b16 %v70
    %v523 = vunpack.c.h.b16 %v70
    %v524 = vunpack.c.l.b16 %v71
    %v525 = vunpack.c.l.b16 %v72
    %v526 = vunpack.c.h.b16 %v72
    %v527 = vunpack.c.l.b16 %v73
    %v528 = vunpack.c.l.b16 %v74
    %v529 = vunpack.c.h.b16 %v74
    %v530 = vunpack.c.l.b16 %v75
    %v531 = vunpack.c.l.b16 %v76
    %v532 = vunpack.c.h.b16 %v76
    %v533 = vunpack.c.l.b16 %v77
    %v534 = vunpack.c.l.b16 %v78
    %v535 = vunpack.c.h.b16 %v78
    %v536 = vunpack.c.l.b16 %v79
    %v537 = vunpack.c.l.b16 %v80
    %v538 = vunpack.c.h.b16 %v80
    %v539 = vunpack.c.l.b16 %v81
    %v540 = vunpack.c.l.b16 %v82
    %v541 = vunpack.c.h.b16 %v82
    %v542 = vunpack.c.l.b16 %v83
    %v543 = vunpack.c.l.b16 %v84
    %v544 = vunpack.c.h.b16 %v84
    %v545 = vunpack.c.l.b16 %v85
    %v546 = vunpack.c.l.b16 %v86
    %v547 = vunpack.c.h.b16 %v86
    %v548 = vunpack.c.l.b16 %v87
    %v549 = vunpack.c.l.b16 %v88
    %v550 = vunpack.c.h.b16 %v88
    %v551 = vunpack.c.l.b16 %v89
    %v552 = vunpack.c.l.b16 %v90
    %v553 = vunpack.c.h.b16 %v90
    %v554 = vunpack.c.l.b16 %v91
    %v555 = vunpack.c.l.b16 %v92
    %v556 = vunpack.c.h.b16 %v92
    %v557 = vunpack.c.l.b16 %v93
    %v558 = vunpack.c.l.b16 %v94
    %v559 = vunpack.c.h.b16 %v94
    %v560 = vunpack.c.l.b16 %v95
    %v561 = vunpack.c.l.b16 %v96
    %v562 = vunpack.c.h.b16 %v96
    %v563 = vunpack.c.l.b16 %v97
    %v564 = vunpack.c.l.b16 %v98
    %v565 = vunpack.c.h.b16 %v98
    %v566 = vunpack.c.l.b16 %v99
    %v567 = vunpack.c.l.b16 %v100
    %v568 = vunpack.c.h.b16 %v100
    %v569 = vunpack.c.l.b16 %v101
    %v570 = vunpack.c.l.b16 %v102
    %v571 = vunpack.c.h.b16 %v102
    %v572 = vunpack.c.l.b16 %v103
    %v573 = vunpack.c.l.b16 %v104
    %v574 = vunpack.c.h.b16 %v104
    %v575 = vunpack.c.l.b16 %v105
    %v576 = vunpack.c.l.b16 %v106
    %v577 = vunpack.c.h.b16 %v106
    %v578 = vunpack.c.l.b16 %v107
    %v579 = vunpack.c.l.b16 %v108
    %v580 = vunpack.c.h.b16 %v108
    %v581 = vunpack.c.l.b16 %v109
    %v582 = vunpack.c.l.b16 %v110
    %v583 = vunpack.c.h.b16 %v110
    %v584 = vunpack.c.l.b16 %v111
    %v585 = vunpack.c.l.b16 %v112
    %v586 = vunpack.c.h.b16 %v112
    %v587 = vunpack.c.l.b16 %v113
    %v588 = vunpack.c.l.b16 %v114
    %v589 = vunpack.c.h.b16 %v114
    %v590 = vunpack.c.l.b16 %v115
    %v591 = vunpack.c.l.b16 %v116
    %v592 = vunpack.c.h.b16 %v116
    %v593 = vunpack.c.l.b16 %v117
    %v594 = vunpack.c.l.b16 %v118
    %v595 = vunpack.c.h.b16 %v118
    %v596 = vunpack.c.l.b16 %v119
    %v597 = vunpack.c.l.b16 %v120
    %v598 = vunpack.c.h.b16 %v120
    %v599 = vunpack.c.l.b16 %v121
    %v600 = vunpack.c.l.b16 %v122
    %v601 = vunpack.c.h.b16 %v122
    %v602 = vunpack.c.l.b16 %v123
    %v603 = vunpack.c.l.b16 %v124
    %v604 = vunpack.c.h.b16 %v124
    %v605 = vunpack.c.l.b16 %v125
    %v606 = vunpack.c.l.b16 %v126
    %v607 = vunpack.c.h.b16 %v126
    %v608 = vunpack.c.l.b16 %v127
    %v609 = vunpack.c.l.b16 %v128
    %v610 = vunpack.c.h.b16 %v128
    %v611 = vunpack.c.l.b16 %v129
    %v612 = vunpack.c.l.b16 %v130
    %v613 = vunpack.c.h.b16 %v130
    %v614 = vunpack.c.l.b16 %v131
    %v615 = vunpack.c.l.b16 %v132
    %v616 = vunpack.c.h.b16 %v132
    %v617 = vunpack.c.l.b16 %v133
    %v618 = vunpack.c.l.b16 %v134
    %v619 = vunpack.c.h.b16 %v134
    %v620 = vunpack.c.l.b16 %v135
    %v621 = vunpack.c.l.b16 %v136
    %v622 = vunpack.c.h.b16 %v136
    %v623 = vunpack.c.l.b16 %v137
    %v624 = vunpack.c.l.b16 %v138
    %v625 = vunpack.c.h.b16 %v138
    %v626 = vunpack.c.l.b16 %v139
    %v627 = vunpack.c.l.b16 %v140
    %v628 = vunpack.c.h.b16 %v140
    %v629 = vunpack.c.l.b16 %v141
    %v630 = vunpack.c.l.b16 %v142
    %v631 = vunpack.c.h.b16 %v142
    %v632 = vunpack.c.l.b16 %v143
    %v633 = vunpack.c.l.b16 %v144
    %v634 = vunpack.c.h.b16 %v144
    %v635 = vunpack.c.l.b16 %v145
    %v636 = vunpack.c.l.b16 %v146
    %v637 = vunpack.c.h.b16 %v146
    %v638 = vunpack.c.l.b16 %v147
    %v639 = vunpack.c.l.b16 %v148
    %v640 = vunpack.c.h.b16 %v148
    %v641 = vunpack.c.l.b16 %v149
    %v642 = vunpack.c.l.b16 %v150
    %v643 = vunpack.c.h.b16 %v150
    %v644 = vunpack.c.l.b16 %v151
    %v645 = vunpack.c.l.b16 %v152
    %v646 = vunpack.c.h.b16 %v152
    %v647 = vunpack.c.l.b16 %v153
    %v648 = vunpack.c.l.b16 %v154
    %v649 = vunpack.c.h.b16 %v154
    %v650 = vunpack.c.l.b16 %v155
    %v651 = vunpack.c.l.b16 %v156
    %v652 = vunpack.c.h.b16 %v156
    %v653 = vunpack.c.l.b16 %v157
    %v654 = vunpack.c.l.b16 %v158
    %v655 = vunpack.c.h.b16 %v158
    %v656 = vunpack.c.l.b16 %v159
    %v657 = vunpack.c.l.b16 %v160
    %v658 = vunpack.c.h.b16 %v160
    %v659 = vunpack.c.l.b16 %v161
    %v660 = vunpack.c.l.b16 %v162
    %v661 = vunpack.c.h.b16 %v162
    %v662 = vunpack.c.l.b16 %v163
    %v663 = vunpack.c.l.b16 %v164
    %v664 = vunpack.c.h.b16 %v164
    %v665 = vunpack.c.l.b16 %v165
    %v666 = vunpack.c.l.b16 %v166
    %v667 = vunpack.c.h.b16 %v166
    %v668 = vunpack.c.l.b16 %v167
    %v669 = vunpack.c.l.b16 %v168
    %v670 = vunpack.c.h.b16 %v168
    %v671 = vunpack.c.l.b16 %v169
    %v672 = vunpack.c.l.b16 %v170
    %v673 = vunpack.c.h.b16 %v170
    %v674 = vunpack.c.l.b16 %v171
    %v675 = vunpack.c.l.b16 %v172
    %v676 = vunpack.c.h.b16 %v172
    %v677 = vunpack.c.l.b16 %v173
    %v678 = vunpack.c.l.b16 %v174
    %v679 = vunpack.c.h.b16 %v174
    %v680 = vunpack.c.l.b16 %v175
    %v681 = vunpack.c.l.b16 %v176
    %v682 = vunpack.c.h.b16 %v176
    %v683 = vunpack.c.l.b16 %v177
    %v684 = vunpack.c.l.b16 %v178
    %v685 = vunpack.c.h.b16 %v178
    %v686 = vunpack.c.l.b16 %v179
    %v687 = vunpack.c.l.b16 %v180
    %v688 = vunpack.c.h.b16 %v180
    %v689 = vunpack.c.l.b16 %v181
    %v690 = vunpack.c.l.b16 %v182
    %v691 = vunpack.c.h.b16 %v182
    %v692 = vunpack.c.l.b16 %v183
    %v693 = vunpack.c.l.b16 %v184
    %v694 = vunpack.c.h.b16 %v184
    %v695 = vunpack.c.l.b16 %v185
    %v696 = vunpack.c.l.b16 %v186
    %v697 = vunpack.c.h.b16 %v186
    %v698 = vunpack.c.l.b16 %v187
    %v699 = vunpack.c.l.b16 %v188
    %v700 = vunpack.c.h.b16 %v188
    %v701 = vunpack.c.l.b16 %v189
    %v702 = vunpack.c.l.b16 %v190
    %v703 = vunpack.c.h.b16 %v190
    %v704 = vunpack.c.l.b16 %v191
    %v705 = vunpack.c.l.b16 %v192
    %v706 = vunpack.c.h.b16 %v192
    %v707 = vunpack.c.l.b16 %v193
    %v708 = vunpack.c.l.b16 %v194
    %v709 = vunpack.c.h.b16 %v194
    %v710 = vunpack.c.l.b16 %v195
    %v711 = vunpack.c.l.b16 %v196
    %v712 = vunpack.c.h.b16 %v196
    %v713 = vunpack.c.l.b16 %v197
    %v714 = vunpack.c.l.b16 %v198
    %v715 = vunpack.c.h.b16 %v198
    %v716 = vunpack.c.l.b16 %v199
    %v717 = vunpack.c.l.b16 %v200
    %v718 = vunpack.c.h.b16 %v200
    %v719 = vunpack.c.l.b16 %v201
    %v720 = vunpack.c.l.b16 %v202
    %v721 = vunpack.c.h.b16 %v202
    %v722 = vunpack.c.l.b16 %v203
    %v723 = vunpack.c.l.b16 %v204
    %v724 = vunpack.c.h.b16 %v204
    %v725 = vunpack.c.l.b16 %v205
    %v726 = vunpack.c.l.b16 %v206
    %v727 = vunpack.c.h.b16 %v206
    %v728 = vunpack.c.l.b16 %v207
    %v729 = vunpack.c.l.b16 %v208
    %v730 = vunpack.c.h.b16 %v208
    %v731 = vunpack.c.l.b16 %v209
    %v732 = vunpack.c.l.b16 %v210
    %v733 = vunpack.c.h.b16 %v210
    %v734 = vunpack.c.l.b16 %v211
    %v735 = vunpack.c.l.b16 %v212
    %v736 = vunpack.c.h.b16 %v212
    %v737 = vunpack.c.l.b16 %v213
    %v738 = vunpack.c.l.b16 %v214
    %v739 = vunpack.c.h.b16 %v214
    %v740 = vunpack.c.l.b16 %v215
    %v741 = vunpack.c.l.b16 %v216
    %v742 = vunpack.c.h.b16 %v216
    %v743 = vunpack.c.l.b16 %v217
    %v744 = vunpack.c.l.b16 %v218
    %v745 = vunpack.c.h.b16 %v218
    %v746 = vunpack.c.l.b16 %v219
    %v747 = vunpack.c.l.b16 %v220
    %v748 = vunpack.c.h.b16 %v220
    %v749 = vunpack.c.l.b16 %v221
    %v750 = vunpack.c.l.b16 %v222
    %v751 = vunpack.c.h.b16 %v222
    %v752 = vunpack.c.l.b16 %v223
    %v753 = vunpack.c.l.b16 %v224
    %v754 = vunpack.c.h.b16 %v224
    %v755 = vunpack.c.l.b16 %v225
    %v756 = vunpack.c.l.b16 %v226
    %v757 = vunpack.c.h.b16 %v226
    %v758 = vunpack.c.l.b16 %v227
    %v759 = vpack.c.b16 %v468, %v465
    %v760 = vpack.c.b16 %v469, %v466
    %v761 = vpack.c.b16 %v470, %v467
    %v762 = vpack.c.b16 %v474, %v471
    %v763 = vpack.c.b16 %v475, %v472
    %v764 = vpack.c.b16 %v476, %v473
    %v765 = vpack.c.b16 %v480, %v477
    %v766 = vpack.c.b16 %v481, %v478
    %v767 = vpack.c.b16 %v482, %v479
    %v768 = vpack.c.b16 %v486, %v483
    %v769 = vpack.c.b16 %v487, %v484
    %v770 = vpack.c.b16 %v488, %v485
    %v771 = vpack.c.b16 %v492, %v489
    %v772 = vpack.c.b16 %v493, %v490
    %v773 = vpack.c.b16 %v494, %v491
    %v774 = vpack.c.b16 %v498, %v495
    %v775 = vpack.c.b16 %v499, %v496
    %v776 = vpack.c.b16 %v500, %v497
    %v777 = vpack.c.b16 %v504, %v501
    %v778 = vpack.c.b16 %v505, %v502
    %v779 = vpack.c.b16 %v506, %v503
    %v780 = vpack.c.b16 %v510, %v507
    %v781 = vpack.c.b16 %v511, %v508
    %v782 = vpack.c.b16 %v512, %v509
    %v783 = vpack.c.b16 %v516, %v513
    %v784 = vpack.c.b16 %v517, %v514
    %v785 = vpack.c.b16 %v518, %v515
    %v786 = vpack.c.b16 %v522, %v519
    %v787 = vpack.c.b16 %v523, %v520
    %v788 = vpack.c.b16 %v524, %v521
    %v789 = vpack.c.b16 %v528, %v525
    %v790 = vpack.c.b16 %v529, %v526
    %v791 = vpack.c.b16 %v530, %v527
    %v792 = vpack.c.b16 %v534, %v531
    %v793 = vpack.c.b16 %v535, %v532
    %v794 = vpack.c.b16 %v536, %v533
    %v795 = vpack.c.b16 %v540, %v537
    %v796 = vpack.c.b16 %v541, %v538
    %v797 = vpack.c.b16 %v542, %v539
    %v798 = vpack.c.b16 %v546, %v543
    %v799 = vpack.c.b16 %v547, %v544
    %v800 = vpack.c.b16 %v548, %v545
    %v801 = vpack.c.b16 %v552, %v549
    %v802 = vpack.c.b16 %v553, %v550
    %v803 = vpack.c.b16 %v554, %v551
    %v804 = vpack.c.b16 %v558, %v555
    %v805 = vpack.c.b16 %v559, %v556
    %v806 = vpack.c.b16 %v560, %v557
    %v807 = vpack.c.b16 %v564, %v561
    %v808 = vpack.c.b16 %v565, %v562
    %v809 = vpack.c.b16 %v566, %v563
    %v810 = vpack.c.b16 %v570, %v567
    %v811 = vpack.c.b16 %v571, %v568
    %v812 = vpack.c.b16 %v572, %v569
    %v813 = vpack.c.b16 %v576, %v573
    %v814 = vpack.c.b16 %v577, %v574
    %v815 = vpack.c.b16 %v578, %v575
    %v816 = vpack.c.b16 %v582, %v579
    %v817 = vpack.c.b16 %v583, %v580
    %v818 = vpack.c.b16 %v584, %v581
    %v819 = vpack.c.b16 %v588, %v585
    %v820 = vpack.c.b16 %v589, %v586
    %v821 = vpack.c.b16 %v590, %v587
    %v822 = vpack.c.b16 %v594, %v591
    %v823 = vpack.c.b16 %v595, %v592
    %v824 = vpack.c.b16 %v596, %v593
    %v825 = vpack.c.b16 %v600, %v597
    %v826 = vpack.c.b16 %v601, %v598
    %v827 = vpack.c.b16 %v602, %v599
    %v828 = vpack.c.b16 %v606, %v603
    %v829 = vpack.c.b16 %v607, %v604
    %v830 = vpack.c.b16 %v608, %v605
    %v831 = vpack.c.b16 %v612, %v609
    %v832 = vpack.c.b16 %v613, %v610
    %v833 = vpack.c.b16 %v614, %v611
    %v834 = vpack.c.b16 %v618, %v615
    %v835 = vpack.c.b16 %v619, %v616
    %v836 = vpack.c.b16 %v620, %v617
    %v837 = vpack.c.b16 %v624, %v621
    %v838 = vpack.c.b16 %v625, %v622
    %v839 = vpack.c.b16 %v626, %v623
    %v840 = vpack.c.b16 %v630, %v627
    %v841 = vpack.c.b16 %v631, %v628
    %v842 = vpack.c.b16 %v632, %v629
    %v843 = vpack.c.b16 %v636, %v633
    %v844 = vpack.c.b16 %v637, %v634
    %v845 = vpack.c.b16 %v638, %v635
    %v846 = vpack.c.b16 %v642, %v639
    %v847 = vpack.c.b16 %v643, %v640
    %v848 = vpack.c.b16 %v644, %v641
    %v849 = vpack.c.b16 %v648, %v645
    %v850 = vpack.c.b16 %v649, %v646
    %v851 = vpack.c.b16 %v650, %v647
    %v852 = vpack.c.b16 %v654, %v651
    %v853 = vpack.c.b16 %v655, %v652
    %v854 = vpack.c.b16 %v656, %v653
    %v855 = vpack.c.b16 %v660, %v657
    %v856 = vpack.c.b16 %v661, %v658
    %v857 = vpack.c.b16 %v662, %v659
    %v858 = vpack.c.b16 %v666, %v663
    %v859 = vpack.c.b16 %v667, %v664
    %v860 = vpack.c.b16 %v668, %v665
    %v861 = vpack.c.b16 %v672, %v669
    %v862 = vpack.c.b16 %v673, %v670
    %v863 = vpack.c.b16 %v674, %v671
    %v864 = vpack.c.b16 %v678, %v675
    %v865 = vpack.c.b16 %v679, %v676
    %v866 = vpack.c.b16 %v680, %v677
    %v867 = vpack.c.b16 %v684, %v681
    %v868 = vpack.c.b16 %v685, %v682
    %v869 = vpack.c.b16 %v686, %v683
    %v870 = vpack.c.b16 %v690, %v687
    %v871 = vpack.c.b16 %v691, %v688
    %v872 = vpack.c.b16 %v692, %v689
    %v873 = vpack.c.b16 %v696, %v693
    %v874 = vpack.c.b16 %v697, %v694
    %v875 = vpack.c.b16 %v698, %v695
    %v876 = vpack.c.b16 %v702, %v699
    %v877 = vpack.c.b16 %v703, %v700
    %v878 = vpack.c.b16 %v704, %v701
    %v879 = vpack.c.b16 %v708, %v705
    %v880 = vpack.c.b16 %v709, %v706
    %v881 = vpack.c.b16 %v710, %v707
    %v882 = vpack.c.b16 %v714, %v711
    %v883 = vpack.c.b16 %v715, %v712
    %v884 = vpack.c.b16 %v716, %v713
    %v885 = vpack.c.b16 %v720, %v717
    %v886 = vpack.c.b16 %v721, %v718
    %v887 = vpack.c.b16 %v722, %v719
    %v888 = vpack.c.b16 %v726, %v723
    %v889 = vpack.c.b16 %v727, %v724
    %v890 = vpack.c.b16 %v728, %v725
    %v891 = vpack.c.b16 %v732, %v729
    %v892 = vpack.c.b16 %v733, %v730
    %v893 = vpack.c.b16 %v734, %v731
    %v894 = vpack.c.b16 %v738, %v735
    %v895 = vpack.c.b16 %v739, %v736
    %v896 = vpack.c.b16 %v740, %v737
    %v897 = vpack.c.b16 %v744, %v741
    %v898 = vpack.c.b16 %v745, %v742
    %v899 = vpack.c.b16 %v746, %v743
    %v900 = vpack.c.b16 %v750, %v747
    %v901 = vpack.c.b16 %v751, %v748
    %v902 = vpack.c.b16 %v752, %v749
    %v903 = vpack.c.b16 %v756, %v753
    %v904 = vpack.c.b16 %v757, %v754
    %v905 = vpack.c.b16 %v758, %v755
    %vm1053 = vcmask 130048
    %v1055 = vsel %vm1053, %v262, 0
    %1057 = vmatprep.subr.bf16.mxu0 %v760
    %1058 = vmatpush1.bf16.msra.mxu0 %v759
    %1059 = vmatprep.subr.bf16.mxu0 %v763
    %1060 = vmatpush1.bf16.msra.mxu0 %v762
    %1061 = vmatprep.subr.bf16.mxu0 %v766
    %1062 = vmatpush1.bf16.msra.mxu0 %v765
    %1063 = vmatprep.subr.bf16.mxu0 %v769
    %1064 = vmatpush1.bf16.msra.mxu0 %v768
    %1065 = vmatprep.subr.bf16.mxu0 %v772
    %1066 = vmatpush1.bf16.msra.mxu0 %v771
    %1067 = vmatprep.subr.bf16.mxu0 %v775
    %1068 = vmatpush1.bf16.msra.mxu0 %v774
    %1069 = vmatprep.subr.bf16.mxu0 %v778
    %1070 = vmatpush1.bf16.msra.mxu0 %v777
    %1071 = vmatprep.subr.bf16.mxu0 %v781
    %1072 = vmatpush1.bf16.msra.mxu0 %v780
    %1073 = vmatprep.subr.bf16.mxu0 %v784
    %1074 = vmatpush1.bf16.msra.mxu0 %v783
    %1075 = vmatprep.subr.bf16.mxu0 %v787
    %1076 = vmatpush1.bf16.msra.mxu0 %v786
    %1077 = vmatprep.subr.bf16.mxu0 %v790
    %1078 = vmatpush1.bf16.msra.mxu0 %v789
    %1079 = vmatprep.subr.bf16.mxu0 %v793
    %1080 = vmatpush1.bf16.msra.mxu0 %v792
    %1081 = vmatprep.subr.bf16.mxu0 %v796
    %1082 = vmatpush1.bf16.msra.mxu0 %v795
    %1083 = vmatprep.subr.bf16.mxu0 %v799
    %1084 = vmatpush1.bf16.msra.mxu0 %v798
    %1085 = vmatprep.subr.bf16.mxu0 %v802
    %1086 = vmatpush1.bf16.msra.mxu0 %v801
    %1087 = vmatprep.subr.bf16.mxu0 %v805
    %1088 = vmatpush1.bf16.msra.mxu0 %v804
    %1089 = vmatprep.mubr.bf16.mxu0 %v257
    %1090 = vmatmul.mubr.bf16.gmra.mrb[0].mxu0 %v256
    %v1091 = vpop.f32.mrb[0].mxu0
    %v1092 = vadd.f32 %v233, %v1091
    %v1093 = vpop.f32.mrb[0].mxu0
    %v1094 = vadd.f32 %v237, %v1093
    %v1095 = vpop.f32.mrb[0].mxu0
    %v1096 = vpop.f32.mrb[0].mxu0
    %1097 = vdwg.mxu0
    %1098 = vmatprep.subr.bf16.mxu0 %v808
    %1099 = vmatpush1.bf16.msra.mxu0 %v807
    %1100 = vmatprep.subr.bf16.mxu0 %v811
    %1101 = vmatpush1.bf16.msra.mxu0 %v810
    %1102 = vmatprep.subr.bf16.mxu0 %v814
    %1103 = vmatpush1.bf16.msra.mxu0 %v813
    %1104 = vmatprep.subr.bf16.mxu0 %v817
    %1105 = vmatpush1.bf16.msra.mxu0 %v816
    %1106 = vmatprep.subr.bf16.mxu0 %v820
    %1107 = vmatpush1.bf16.msra.mxu0 %v819
    %1108 = vmatprep.subr.bf16.mxu0 %v823
    %1109 = vmatpush1.bf16.msra.mxu0 %v822
    %1110 = vmatprep.subr.bf16.mxu0 %v826
    %1111 = vmatpush1.bf16.msra.mxu0 %v825
    %1112 = vmatprep.subr.bf16.mxu0 %v829
    %1113 = vmatpush1.bf16.msra.mxu0 %v828
    %1114 = vmatprep.subr.bf16.mxu0 %v832
    %1115 = vmatpush1.bf16.msra.mxu0 %v831
    %1116 = vmatprep.subr.bf16.mxu0 %v835
    %1117 = vmatpush1.bf16.msra.mxu0 %v834
    %1118 = vmatprep.subr.bf16.mxu0 %v838
    %1119 = vmatpush1.bf16.msra.mxu0 %v837
    %1120 = vmatprep.subr.bf16.mxu0 %v841
    %1121 = vmatpush1.bf16.msra.mxu0 %v840
    %1122 = vmatprep.subr.bf16.mxu0 %v844
    %1123 = vmatpush1.bf16.msra.mxu0 %v843
    %1124 = vmatprep.subr.bf16.mxu0 %v847
    %1125 = vmatpush1.bf16.msra.mxu0 %v846
    %1126 = vmatprep.subr.bf16.mxu0 %v850
    %1127 = vmatpush1.bf16.msra.mxu0 %v849
    %1128 = vmatprep.subr.bf16.mxu0 %v853
    %1129 = vmatpush1.bf16.msra.mxu0 %v852
    %1130 = vmatprep.mubr.bf16.mxu0 %v259
    %1131 = vmatmul.mubr.bf16.gmra.mrb[0].mxu0 %v258
    %v1132 = vpop.f32.mrb[0].mxu0
    %v1133 = vadd.f32 %v1092, %v1132
    %v1134 = vpop.f32.mrb[0].mxu0
    %v1135 = vadd.f32 %v1094, %v1134
    %v1136 = vpop.f32.mrb[0].mxu0
    %v1137 = vpop.f32.mrb[0].mxu0
    %1138 = vdwg.mxu0
    %1139 = vmatprep.subr.bf16.mxu0 %v856
    %1140 = vmatpush1.bf16.msra.mxu0 %v855
    %1141 = vmatprep.subr.bf16.mxu0 %v859
    %1142 = vmatpush1.bf16.msra.mxu0 %v858
    %1143 = vmatprep.subr.bf16.mxu0 %v862
    %1144 = vmatpush1.bf16.msra.mxu0 %v861
    %1145 = vmatprep.subr.bf16.mxu0 %v865
    %1146 = vmatpush1.bf16.msra.mxu0 %v864
    %1147 = vmatprep.subr.bf16.mxu0 %v868
    %1148 = vmatpush1.bf16.msra.mxu0 %v867
    %1149 = vmatprep.subr.bf16.mxu0 %v871
    %1150 = vmatpush1.bf16.msra.mxu0 %v870
    %1151 = vmatprep.subr.bf16.mxu0 %v874
    %1152 = vmatpush1.bf16.msra.mxu0 %v873
    %1153 = vmatprep.subr.bf16.mxu0 %v877
    %1154 = vmatpush1.bf16.msra.mxu0 %v876
    %1155 = vmatprep.subr.bf16.mxu0 %v880
    %1156 = vmatpush1.bf16.msra.mxu0 %v879
    %1157 = vmatprep.subr.bf16.mxu0 %v883
    %1158 = vmatpush1.bf16.msra.mxu0 %v882
    %1159 = vmatprep.subr.bf16.mxu0 %v886
    %1160 = vmatpush1.bf16.msra.mxu0 %v885
    %1161 = vmatprep.subr.bf16.mxu0 %v889
    %1162 = vmatpush1.bf16.msra.mxu0 %v888
    %1163 = vmatprep.subr.bf16.mxu0 %v892
    %1164 = vmatpush1.bf16.msra.mxu0 %v891
    %1165 = vmatprep.subr.bf16.mxu0 %v895
    %1166 = vmatpush1.bf16.msra.mxu0 %v894
    %1167 = vmatprep.subr.bf16.mxu0 %v898
    %1168 = vmatpush1.bf16.msra.mxu0 %v897
    %1169 = vmatprep.subr.bf16.mxu0 %v901
    %1170 = vmatpush1.bf16.msra.mxu0 %v900
    %1171 = vmatprep.mubr.bf16.mxu0 %v261
    %1172 = vmatmul.mubr.bf16.gmra.mrb[0].mxu0 %v260
    %v1173 = vpop.f32.mrb[0].mxu0
    %v1174 = vadd.f32 %v1133, %v1173
    %v1175 = vpop.f32.mrb[0].mxu0
    %v1176 = vadd.f32 %v1135, %v1175
    %v1177 = vpop.f32.mrb[0].mxu0
    %v1178 = vpop.f32.mrb[0].mxu0
    %1179 = vdwg.mxu0
    %1180 = vmatprep.subr.bf16.mxu0 %v904
    %1181 = vmatpush1.bf16.msra.mxu0 %v903
    %1182 = vmatprep.subr.bf16.mxu0 0
    %1183 = vmatpush1.bf16.msra.mxu0 0
    %1184 = vmatprep.subr.bf16.mxu0 0
    %1185 = vmatpush1.bf16.msra.mxu0 0
    %1186 = vmatprep.subr.bf16.mxu0 0
    %1187 = vmatpush1.bf16.msra.mxu0 0
    %1188 = vmatprep.subr.bf16.mxu0 0
    %1189 = vmatpush1.bf16.msra.mxu0 0
    %1190 = vmatprep.subr.bf16.mxu0 0
    %1191 = vmatpush1.bf16.msra.mxu0 0
    %1192 = vmatprep.subr.bf16.mxu0 0
    %1193 = vmatpush1.bf16.msra.mxu0 0
    %1194 = vmatprep.subr.bf16.mxu0 0
    %1195 = vmatpush1.bf16.msra.mxu0 0
    %1196 = vmatprep.subr.bf16.mxu0 0
    %1197 = vmatpush1.bf16.msra.mxu0 0
    %1198 = vmatprep.subr.bf16.mxu0 0
    %1199 = vmatpush1.bf16.msra.mxu0 0
    %1200 = vmatprep.subr.bf16.mxu0 0
    %1201 = vmatpush1.bf16.msra.mxu0 0
    %1202 = vmatprep.subr.bf16.mxu0 0
    %1203 = vmatpush1.bf16.msra.mxu0 0
    %1204 = vmatprep.subr.bf16.mxu0 0
    %1205 = vmatpush1.bf16.msra.mxu0 0
    %1206 = vmatprep.subr.bf16.mxu0 0
    %1207 = vmatpush1.bf16.msra.mxu0 0
    %1208 = vmatprep.subr.bf16.mxu0 0
    %1209 = vmatpush1.bf16.msra.mxu0 0
    %1210 = vmatprep.subr.bf16.mxu0 0
    %1211 = vmatpush1.bf16.msra.mxu0 0
    %1212 = vmatprep.mubr.bf16.mxu0 0
    %1213 = vmatmul.mubr.bf16.gmra.mrb[0].mxu0 %v1055
    %v1214 = vpop.f32.mrb[0].mxu0
    %v1215 = vadd.f32 %v1174, %v1214
    %v1216 = vpop.f32.mrb[0].mxu0
    %v1217 = vadd.f32 %v1176, %v1216
    %v1218 = vpop.f32.mrb[0].mxu0
    %v1219 = vpop.f32.mrb[0].mxu0
    %1220 = vdwg.mxu0
    %1221 = vmatprep.subr.bf16.mxu0 0
    %1222 = vmatpush1.bf16.msra.mxu0 %v761
    %1223 = vmatprep.subr.bf16.mxu0 0
    %1224 = vmatpush1.bf16.msra.mxu0 %v764
    %1225 = vmatprep.subr.bf16.mxu0 0
    %1226 = vmatpush1.bf16.msra.mxu0 %v767
    %1227 = vmatprep.subr.bf16.mxu0 0
    %1228 = vmatpush1.bf16.msra.mxu0 %v770
    %1229 = vmatprep.subr.bf16.mxu0 0
    %1230 = vmatpush1.bf16.msra.mxu0 %v773
    %1231 = vmatprep.subr.bf16.mxu0 0
    %1232 = vmatpush1.bf16.msra.mxu0 %v776
    %1233 = vmatprep.subr.bf16.mxu0 0
    %1234 = vmatpush1.bf16.msra.mxu0 %v779
    %1235 = vmatprep.subr.bf16.mxu0 0
    %1236 = vmatpush1.bf16.msra.mxu0 %v782
    %1237 = vmatprep.subr.bf16.mxu0 0
    %1238 = vmatpush1.bf16.msra.mxu0 %v785
    %1239 = vmatprep.subr.bf16.mxu0 0
    %1240 = vmatpush1.bf16.msra.mxu0 %v788
    %1241 = vmatprep.subr.bf16.mxu0 0
    %1242 = vmatpush1.bf16.msra.mxu0 %v791
    %1243 = vmatprep.subr.bf16.mxu0 0
    %1244 = vmatpush1.bf16.msra.mxu0 %v794
    %1245 = vmatprep.subr.bf16.mxu0 0
    %1246 = vmatpush1.bf16.msra.mxu0 %v797
    %1247 = vmatprep.subr.bf16.mxu0 0
    %1248 = vmatpush1.bf16.msra.mxu0 %v800
    %1249 = vmatprep.subr.bf16.mxu0 0
    %1250 = vmatpush1.bf16.msra.mxu0 %v803
    %1251 = vmatprep.subr.bf16.mxu0 0
    %1252 = vmatpush1.bf16.msra.mxu0 %v806
    %1253 = vmatprep.mubr.bf16.mxu0 %v257
    %1254 = vmatmul.mubr.bf16.gmra.mrb[0].mxu0 %v256
    %v1255 = vpop.f32.mrb[0].mxu0
    %v1256 = vadd.f32 %v241, %v1255
    %v1257 = vpop.f32.mrb[0].mxu0
    %v1258 = vpop.f32.mrb[0].mxu0
    %v1259 = vpop.f32.mrb[0].mxu0
    %1260 = vdwg.mxu0
    %1261 = vmatprep.subr.bf16.mxu0 0
    %1262 = vmatpush1.bf16.msra.mxu0 %v809
    %1263 = vmatprep.subr.bf16.mxu0 0
    %1264 = vmatpush1.bf16.msra.mxu0 %v812
    %1265 = vmatprep.subr.bf16.mxu0 0
    %1266 = vmatpush1.bf16.msra.mxu0 %v815
    %1267 = vmatprep.subr.bf16.mxu0 0
    %1268 = vmatpush1.bf16.msra.mxu0 %v818
    %1269 = vmatprep.subr.bf16.mxu0 0
    %1270 = vmatpush1.bf16.msra.mxu0 %v821
    %1271 = vmatprep.subr.bf16.mxu0 0
    %1272 = vmatpush1.bf16.msra.mxu0 %v824
    %1273 = vmatprep.subr.bf16.mxu0 0
    %1274 = vmatpush1.bf16.msra.mxu0 %v827
    %1275 = vmatprep.subr.bf16.mxu0 0
    %1276 = vmatpush1.bf16.msra.mxu0 %v830
    %1277 = vmatprep.subr.bf16.mxu0 0
    %1278 = vmatpush1.bf16.msra.mxu0 %v833
    %1279 = vmatprep.subr.bf16.mxu0 0
    %1280 = vmatpush1.bf16.msra.mxu0 %v836
    %1281 = vmatprep.subr.bf16.mxu0 0
    %1282 = vmatpush1.bf16.msra.mxu0 %v839
    %1283 = vmatprep.subr.bf16.mxu0 0
    %1284 = vmatpush1.bf16.msra.mxu0 %v842
    %1285 = vmatprep.subr.bf16.mxu0 0
    %1286 = vmatpush1.bf16.msra.mxu0 %v845
    %1287 = vmatprep.subr.bf16.mxu0 0
    %1288 = vmatpush1.bf16.msra.mxu0 %v848
    %1289 = vmatprep.subr.bf16.mxu0 0
    %1290 = vmatpush1.bf16.msra.mxu0 %v851
    %1291 = vmatprep.subr.bf16.mxu0 0
    %1292 = vmatpush1.bf16.msra.mxu0 %v854
    %1293 = vmatprep.mubr.bf16.mxu0 %v259
    %1294 = vmatmul.mubr.bf16.gmra.mrb[0].mxu0 %v258
    %v1295 = vpop.f32.mrb[0].mxu0
    %v1296 = vadd.f32 %v1256, %v1295
    %v1297 = vpop.f32.mrb[0].mxu0
    %v1298 = vpop.f32.mrb[0].mxu0
    %v1299 = vpop.f32.mrb[0].mxu0
    %1300 = vdwg.mxu0
    %1301 = vmatprep.subr.bf16.mxu0 0
    %1302 = vmatpush1.bf16.msra.mxu0 %v857
    %1303 = vmatprep.subr.bf16.mxu0 0
    %1304 = vmatpush1.bf16.msra.mxu0 %v860
    %1305 = vmatprep.subr.bf16.mxu0 0
    %1306 = vmatpush1.bf16.msra.mxu0 %v863
    %1307 = vmatprep.subr.bf16.mxu0 0
    %1308 = vmatpush1.bf16.msra.mxu0 %v866
    %1309 = vmatprep.subr.bf16.mxu0 0
    %1310 = vmatpush1.bf16.msra.mxu0 %v869
    %1311 = vmatprep.subr.bf16.mxu0 0
    %1312 = vmatpush1.bf16.msra.mxu0 %v872
    %1313 = vmatprep.subr.bf16.mxu0 0
    %1314 = vmatpush1.bf16.msra.mxu0 %v875
    %1315 = vmatprep.subr.bf16.mxu0 0
    %1316 = vmatpush1.bf16.msra.mxu0 %v878
    %1317 = vmatprep.subr.bf16.mxu0 0
    %1318 = vmatpush1.bf16.msra.mxu0 %v881
    %1319 = vmatprep.subr.bf16.mxu0 0
    %1320 = vmatpush1.bf16.msra.mxu0 %v884
    %1321 = vmatprep.subr.bf16.mxu0 0
    %1322 = vmatpush1.bf16.msra.mxu0 %v887
    %1323 = vmatprep.subr.bf16.mxu0 0
    %1324 = vmatpush1.bf16.msra.mxu0 %v890
    %1325 = vmatprep.subr.bf16.mxu0 0
    %1326 = vmatpush1.bf16.msra.mxu0 %v893
    %1327 = vmatprep.subr.bf16.mxu0 0
    %1328 = vmatpush1.bf16.msra.mxu0 %v896
    %1329 = vmatprep.subr.bf16.mxu0 0
    %1330 = vmatpush1.bf16.msra.mxu0 %v899
    %1331 = vmatprep.subr.bf16.mxu0 0
    %1332 = vmatpush1.bf16.msra.mxu0 %v902
    %1333 = vmatprep.mubr.bf16.mxu0 %v261
    %1334 = vmatmul.mubr.bf16.gmra.mrb[0].mxu0 %v260
    %v1335 = vpop.f32.mrb[0].mxu0
    %v1336 = vadd.f32 %v1296, %v1335
    %v1337 = vpop.f32.mrb[0].mxu0
    %v1338 = vpop.f32.mrb[0].mxu0
    %v1339 = vpop.f32.mrb[0].mxu0
    %1340 = vdwg.mxu0
    %1341 = vmatprep.subr.bf16.mxu0 0
    %1342 = vmatpush1.bf16.msra.mxu0 %v905
    %1343 = vmatprep.subr.bf16.mxu0 0
    %1344 = vmatpush1.bf16.msra.mxu0 0
    %1345 = vmatprep.subr.bf16.mxu0 0
    %1346 = vmatpush1.bf16.msra.mxu0 0
    %1347 = vmatprep.subr.bf16.mxu0 0
    %1348 = vmatpush1.bf16.msra.mxu0 0
    %1349 = vmatprep.subr.bf16.mxu0 0
    %1350 = vmatpush1.bf16.msra.mxu0 0
    %1351 = vmatprep.subr.bf16.mxu0 0
    %1352 = vmatpush1.bf16.msra.mxu0 0
    %1353 = vmatprep.subr.bf16.mxu0 0
    %1354 = vmatpush1.bf16.msra.mxu0 0
    %1355 = vmatprep.subr.bf16.mxu0 0
    %1356 = vmatpush1.bf16.msra.mxu0 0
    %1357 = vmatprep.subr.bf16.mxu0 0
    %1358 = vmatpush1.bf16.msra.mxu0 0
    %1359 = vmatprep.subr.bf16.mxu0 0
    %1360 = vmatpush1.bf16.msra.mxu0 0
    %1361 = vmatprep.subr.bf16.mxu0 0
    %1362 = vmatpush1.bf16.msra.mxu0 0
    %1363 = vmatprep.subr.bf16.mxu0 0
    %1364 = vmatpush1.bf16.msra.mxu0 0
    %1365 = vmatprep.subr.bf16.mxu0 0
    %1366 = vmatpush1.bf16.msra.mxu0 0
    %1367 = vmatprep.subr.bf16.mxu0 0
    %1368 = vmatpush1.bf16.msra.mxu0 0
    %1369 = vmatprep.subr.bf16.mxu0 0
    %1370 = vmatpush1.bf16.msra.mxu0 0
    %1371 = vmatprep.subr.bf16.mxu0 0
    %1372 = vmatpush1.bf16.msra.mxu0 0
    %1373 = vmatprep.mubr.bf16.mxu0 0
    %1374 = vmatmul.mubr.bf16.gmra.mrb[0].mxu0 %v1055
    %v1375 = vpop.f32.mrb[0].mxu0
    %v1376 = vadd.f32 %v1336, %v1375
    %v1377 = vpop.f32.mrb[0].mxu0
    %v1378 = vpop.f32.mrb[0].mxu0
    %v1379 = vpop.f32.mrb[0].mxu0
    %1380 = vdwg.mxu0
    %v1381 = vmax.f32 %v1215, 0.0
    %v1382 = vmax.f32 %v1217, 0.0
    %v1383 = vmax.f32 %v1376, 0.0
    %v1384 = vpack.c.bf16 %v1381, %v1381
    %v1385 = vpack.c.bf16 %v1382, %v1382
    %v1386 = vpack.c.bf16 %v1383, %v1383
    %v1387 = vld [vmem:[%s3] sm:$0xf]
    %v1388 = vld [vmem:[%s3 + $0x4] sm:$0xf]
    %v1389 = vld [vmem:[%s3 + $0x8] sm:$0xf]
    %v1390 = vld [vmem:[%s3 + $0xc] sm:$0xf]
    %v1391 = vld [vmem:[%s3 + $0x10] sm:$0xf]
    %v1392 = vld [vmem:[%s3 + $0x14] sm:$0xf]
    %v1393 = vld [vmem:[%s3 + $0x18] sm:$0xf]
    %v1394 = vld [vmem:[%s3 + $0x1c] sm:$0xf]
    %v1395 = vld [vmem:[%s3 + $0x20] sm:$0xf]
    %v1396 = vld [vmem:[%s3 + $0x24] sm:$0xf]
    %v1397 = vld [vmem:[%s3 + $0x28] sm:$0xf]
    %v1398 = vld [vmem:[%s3 + $0x2c] sm:$0xf]
    %v1399 = vld [vmem:[%s3 + $0x30] sm:$0xf]
    %v1400 = vld [vmem:[%s3 + $0x34] sm:$0xf]
    %v1401 = vld [vmem:[%s3 + $0x38] sm:$0xf]
    %v1402 = vld [vmem:[%s3 + $0x3c] sm:$0xf]
    %v1403 = vld [vmem:[%s3 + $0x40] sm:$0xf]
    %v1404 = vld [vmem:[%s3 + $0x44] sm:$0xf]
    %v1405 = vld [vmem:[%s3 + $0x48] sm:$0xf]
    %v1406 = vld [vmem:[%s3 + $0x4c] sm:$0xf]
    %v1407 = vld [vmem:[%s3 + $0x50] sm:$0xf]
    %v1408 = vld [vmem:[%s3 + $0x54] sm:$0xf]
    %v1409 = vld [vmem:[%s3 + $0x58] sm:$0xf]
    %v1410 = vld [vmem:[%s3 + $0x5c] sm:$0xf]
    %v1411 = vld [vmem:[%s3 + $0x60] sm:$0xf]
    %v1412 = vld [vmem:[%s3 + $0x64] sm:$0xf]
    %v1413 = vld [vmem:[%s3 + $0x68] sm:$0xf]
    %v1414 = vld [vmem:[%s3 + $0x6c] sm:$0xf]
    %v1415 = vld [vmem:[%s3 + $0x70] sm:$0xf]
    %v1416 = vld [vmem:[%s3 + $0x74] sm:$0xf]
    %v1417 = vld [vmem:[%s3 + $0x78] sm:$0xf]
    %v1418 = vld [vmem:[%s3 + $0x7c] sm:$0xf]
    %v1419 = vld [vmem:[%s3 + $0x80] sm:$0xf]
    %v1420 = vld [vmem:[%s3 + $0x84] sm:$0xf]
    %v1421 = vld [vmem:[%s3 + $0x88] sm:$0xf]
    %v1422 = vld [vmem:[%s3 + $0x8c] sm:$0xf]
    %v1423 = vld [vmem:[%s3 + $0x90] sm:$0xf]
    %v1424 = vld [vmem:[%s3 + $0x94] sm:$0x3]
    %v1425 = vld [vmem:[%s4] sm:$0x1]
    %v1427 = vlaneseq
    %v1428 = vshrl.u32 %v1427, 7
    %v1429 = vsub.s32 0, %v1428
    %v1430 = vrot.slane %v1425, %v1429
    %v1470 = vunpack.c.l.b16 %v1387
    %v1471 = vunpack.c.l.b16 %v1388
    %v1472 = vunpack.c.l.b16 %v1389
    %v1473 = vunpack.c.l.b16 %v1390
    %v1474 = vunpack.c.l.b16 %v1391
    %v1475 = vunpack.c.l.b16 %v1392
    %v1476 = vunpack.c.l.b16 %v1393
    %v1477 = vunpack.c.l.b16 %v1394
    %v1478 = vunpack.c.l.b16 %v1395
    %v1479 = vunpack.c.l.b16 %v1396
    %v1480 = vunpack.c.l.b16 %v1397
    %v1481 = vunpack.c.l.b16 %v1398
    %v1482 = vunpack.c.l.b16 %v1399
    %v1483 = vunpack.c.l.b16 %v1400
    %v1484 = vunpack.c.l.b16 %v1401
    %v1485 = vunpack.c.l.b16 %v1402
    %v1486 = vunpack.c.l.b16 %v1403
    %v1487 = vunpack.c.l.b16 %v1404
    %v1488 = vunpack.c.l.b16 %v1405
    %v1489 = vunpack.c.l.b16 %v1406
    %v1490 = vunpack.c.l.b16 %v1407
    %v1491 = vunpack.c.l.b16 %v1408
    %v1492 = vunpack.c.l.b16 %v1409
    %v1493 = vunpack.c.l.b16 %v1410
    %v1494 = vunpack.c.l.b16 %v1411
    %v1495 = vunpack.c.l.b16 %v1412
    %v1496 = vunpack.c.l.b16 %v1413
    %v1497 = vunpack.c.l.b16 %v1414
    %v1498 = vunpack.c.l.b16 %v1415
    %v1499 = vunpack.c.l.b16 %v1416
    %v1500 = vunpack.c.l.b16 %v1417
    %v1501 = vunpack.c.l.b16 %v1418
    %v1502 = vunpack.c.l.b16 %v1419
    %v1503 = vunpack.c.l.b16 %v1420
    %v1504 = vunpack.c.l.b16 %v1421
    %v1505 = vunpack.c.l.b16 %v1422
    %v1506 = vunpack.c.l.b16 %v1423
    %v1507 = vunpack.c.l.b16 %v1424
    %v1508 = vpack.c.b16 %v1471, %v1470
    %v1509 = vpack.c.b16 %v1473, %v1472
    %v1510 = vpack.c.b16 %v1475, %v1474
    %v1511 = vpack.c.b16 %v1477, %v1476
    %v1512 = vpack.c.b16 %v1479, %v1478
    %v1513 = vpack.c.b16 %v1481, %v1480
    %v1514 = vpack.c.b16 %v1483, %v1482
    %v1515 = vpack.c.b16 %v1485, %v1484
    %v1516 = vpack.c.b16 %v1487, %v1486
    %v1517 = vpack.c.b16 %v1489, %v1488
    %v1518 = vpack.c.b16 %v1491, %v1490
    %v1519 = vpack.c.b16 %v1493, %v1492
    %v1520 = vpack.c.b16 %v1495, %v1494
    %v1521 = vpack.c.b16 %v1497, %v1496
    %v1522 = vpack.c.b16 %v1499, %v1498
    %v1523 = vpack.c.b16 %v1501, %v1500
    %v1524 = vpack.c.b16 %v1503, %v1502
    %v1525 = vpack.c.b16 %v1505, %v1504
    %v1526 = vpack.c.b16 %v1507, %v1506
    %vm1545 = vcmask 359424
    %v1547 = vsel %vm1545, %v1386, 0
    %vm1549 = vcmask 1045504
    %v1551 = vsel %vm1549, %v1526, 0
    %1553 = vmatprep.subr.bf16.mxu0 0
    %1554 = vmatpush1.bf16.msra.mxu0 %v1508
    %1555 = vmatprep.subr.bf16.mxu0 0
    %1556 = vmatpush1.bf16.msra.mxu0 %v1509
    %1557 = vmatprep.subr.bf16.mxu0 0
    %1558 = vmatpush1.bf16.msra.mxu0 %v1510
    %1559 = vmatprep.subr.bf16.mxu0 0
    %1560 = vmatpush1.bf16.msra.mxu0 %v1511
    %1561 = vmatprep.subr.bf16.mxu0 0
    %1562 = vmatpush1.bf16.msra.mxu0 %v1512
    %1563 = vmatprep.subr.bf16.mxu0 0
    %1564 = vmatpush1.bf16.msra.mxu0 %v1513
    %1565 = vmatprep.subr.bf16.mxu0 0
    %1566 = vmatpush1.bf16.msra.mxu0 %v1514
    %1567 = vmatprep.subr.bf16.mxu0 0
    %1568 = vmatpush1.bf16.msra.mxu0 %v1515
    %1569 = vmatprep.subr.bf16.mxu0 0
    %1570 = vmatpush1.bf16.msra.mxu0 %v1516
    %1571 = vmatprep.subr.bf16.mxu0 0
    %1572 = vmatpush1.bf16.msra.mxu0 %v1517
    %1573 = vmatprep.subr.bf16.mxu0 0
    %1574 = vmatpush1.bf16.msra.mxu0 %v1518
    %1575 = vmatprep.subr.bf16.mxu0 0
    %1576 = vmatpush1.bf16.msra.mxu0 %v1519
    %1577 = vmatprep.subr.bf16.mxu0 0
    %1578 = vmatpush1.bf16.msra.mxu0 %v1520
    %1579 = vmatprep.subr.bf16.mxu0 0
    %1580 = vmatpush1.bf16.msra.mxu0 %v1521
    %1581 = vmatprep.subr.bf16.mxu0 0
    %1582 = vmatpush1.bf16.msra.mxu0 %v1522
    %1583 = vmatprep.subr.bf16.mxu0 0
    %1584 = vmatpush1.bf16.msra.mxu0 %v1523
    %1585 = vmatprep.mubr.bf16.mxu0 %v1385
    %1586 = vmatmul.mubr.bf16.gmra.mrb[0].mxu0 %v1384
    %v1587 = vpop.f32.mrb[0].mxu0
    %v1588 = vadd.f32 %v1430, %v1587
    %v1589 = vpop.f32.mrb[0].mxu0
    %v1590 = vpop.f32.mrb[0].mxu0
    %v1591 = vpop.f32.mrb[0].mxu0
    %1592 = vdwg.mxu0
    %1593 = vmatprep.subr.bf16.mxu0 0
    %1594 = vmatpush1.bf16.msra.mxu0 %v1524
    %1595 = vmatprep.subr.bf16.mxu0 0
    %1596 = vmatpush1.bf16.msra.mxu0 %v1525
    %1597 = vmatprep.subr.bf16.mxu0 0
    %1598 = vmatpush1.bf16.msra.mxu0 %v1551
    %1599 = vmatprep.subr.bf16.mxu0 0
    %1600 = vmatpush1.bf16.msra.mxu0 0
    %1601 = vmatprep.subr.bf16.mxu0 0
    %1602 = vmatpush1.bf16.msra.mxu0 0
    %1603 = vmatprep.subr.bf16.mxu0 0
    %1604 = vmatpush1.bf16.msra.mxu0 0
    %1605 = vmatprep.subr.bf16.mxu0 0
    %1606 = vmatpush1.bf16.msra.mxu0 0
    %1607 = vmatprep.subr.bf16.mxu0 0
    %1608 = vmatpush1.bf16.msra.mxu0 0
    %1609 = vmatprep.subr.bf16.mxu0 0
    %1610 = vmatpush1.bf16.msra.mxu0 0
    %1611 = vmatprep.subr.bf16.mxu0 0
    %1612 = vmatpush1.bf16.msra.mxu0 0
    %1613 = vmatprep.subr.bf16.mxu0 0
    %1614 = vmatpush1.bf16.msra.mxu0 0
    %1615 = vmatprep.subr.bf16.mxu0 0
    %1616 = vmatpush1.bf16.msra.mxu0 0
    %1617 = vmatprep.subr.bf16.mxu0 0
    %1618 = vmatpush1.bf16.msra.mxu0 0
    %1619 = vmatprep.subr.bf16.mxu0 0
    %1620 = vmatpush1.bf16.msra.mxu0 0
    %1621 = vmatprep.subr.bf16.mxu0 0
    %1622 = vmatpush1.bf16.msra.mxu0 0
    %1623 = vmatprep.subr.bf16.mxu0 0
    %1624 = vmatpush1.bf16.msra.mxu0 0
    %1625 = vmatprep.mubr.bf16.mxu0 0
    %1626 = vmatmul.mubr.bf16.gmra.mrb[0].mxu0 %v1547
    %v1627 = vpop.f32.mrb[0].mxu0
    %v1628 = vadd.f32 %v1588, %v1627
    %v1629 = vpop.f32.mrb[0].mxu0
    %v1630 = vpop.f32.mrb[0].mxu0
    %v1631 = vpop.f32.mrb[0].mxu0
    %1632 = vdwg.mxu0
    %v1633 = vmax.f32 %v1628, 0.0
    %v1634 = vpack.c.bf16 %v1633, %v1633
    %v1635 = vld [vmem:[%s5] sm:$0xf]
    %v1636 = vld [vmem:[%s5 + $0x4] sm:$0xf]
    %v1637 = vld [vmem:[%s5 + $0x8] sm:$0xf]
    %v1638 = vld [vmem:[%s5 + $0xc] sm:$0xf]
    %v1639 = vld [vmem:[%s5 + $0x10] sm:$0xf]
    %v1640 = vld [vmem:[%s5 + $0x14] sm:$0xf]
    %v1641 = vld [vmem:[%s5 + $0x18] sm:$0xf]
    %v1642 = vld [vmem:[%s5 + $0x1c] sm:$0xf]
    %v1643 = vld [vmem:[%s5 + $0x20] sm:$0xf]
    %v1644 = vld [vmem:[%s5 + $0x24] sm:$0xf]
    %v1645 = vld [vmem:[%s5 + $0x28] sm:$0xf]
    %v1646 = vld [vmem:[%s5 + $0x2c] sm:$0xf]
    %v1647 = vld [vmem:[%s5 + $0x30] sm:$0x3]
    %v1648 = vld [vmem:[%s6] sm:$0x1]
    %v1650 = vlaneseq
    %v1651 = vshrl.u32 %v1650, 7
    %v1652 = vsub.s32 0, %v1651
    %v1653 = vrot.slane %v1648, %v1652
    %v1668 = vunpack.c.l.b16 %v1635
    %v1669 = vunpack.c.l.b16 %v1636
    %v1670 = vunpack.c.l.b16 %v1637
    %v1671 = vunpack.c.l.b16 %v1638
    %v1672 = vunpack.c.l.b16 %v1639
    %v1673 = vunpack.c.l.b16 %v1640
    %v1674 = vunpack.c.l.b16 %v1641
    %v1675 = vunpack.c.l.b16 %v1642
    %v1676 = vunpack.c.l.b16 %v1643
    %v1677 = vunpack.c.l.b16 %v1644
    %v1678 = vunpack.c.l.b16 %v1645
    %v1679 = vunpack.c.l.b16 %v1646
    %v1680 = vunpack.c.l.b16 %v1647
    %v1681 = vpack.c.b16 %v1669, %v1668
    %v1682 = vpack.c.b16 %v1671, %v1670
    %v1683 = vpack.c.b16 %v1673, %v1672
    %v1684 = vpack.c.b16 %v1675, %v1674
    %v1685 = vpack.c.b16 %v1677, %v1676
    %v1686 = vpack.c.b16 %v1679, %v1678
    %v1687 = vpack.c.b16 %v1680, %v1680
    %vm1694 = vcmask 818176
    %v1696 = vsel %vm1694, %v1634, 0
    %vm1698 = vcmask 1041408
    %v1700 = vsel %vm1698, %v1687, 0
    %1702 = vmatprep.subr.bf16.mxu0 0
    %1703 = vmatpush1.bf16.msra.mxu0 %v1681
    %1704 = vmatprep.subr.bf16.mxu0 0
    %1705 = vmatpush1.bf16.msra.mxu0 %v1682
    %1706 = vmatprep.subr.bf16.mxu0 0
    %1707 = vmatpush1.bf16.msra.mxu0 %v1683
    %1708 = vmatprep.subr.bf16.mxu0 0
    %1709 = vmatpush1.bf16.msra.mxu0 %v1684
    %1710 = vmatprep.subr.bf16.mxu0 0
    %1711 = vmatpush1.bf16.msra.mxu0 %v1685
    %1712 = vmatprep.subr.bf16.mxu0 0
    %1713 = vmatpush1.bf16.msra.mxu0 %v1686
    %1714 = vmatprep.subr.bf16.mxu0 0
    %1715 = vmatpush1.bf16.msra.mxu0 %v1700
    %1716 = vmatprep.subr.bf16.mxu0 0
    %1717 = vmatpush1.bf16.msra.mxu0 0
    %1718 = vmatprep.subr.bf16.mxu0 0
    %1719 = vmatpush1.bf16.msra.mxu0 0
    %1720 = vmatprep.subr.bf16.mxu0 0
    %1721 = vmatpush1.bf16.msra.mxu0 0
    %1722 = vmatprep.subr.bf16.mxu0 0
    %1723 = vmatpush1.bf16.msra.mxu0 0
    %1724 = vmatprep.subr.bf16.mxu0 0
    %1725 = vmatpush1.bf16.msra.mxu0 0
    %1726 = vmatprep.subr.bf16.mxu0 0
    %1727 = vmatpush1.bf16.msra.mxu0 0
    %1728 = vmatprep.subr.bf16.mxu0 0
    %1729 = vmatpush1.bf16.msra.mxu0 0
    %1730 = vmatprep.subr.bf16.mxu0 0
    %1731 = vmatpush1.bf16.msra.mxu0 0
    %1732 = vmatprep.subr.bf16.mxu0 0
    %1733 = vmatpush1.bf16.msra.mxu0 0
    %1734 = vmatprep.mubr.bf16.mxu0 0
    %1735 = vmatmul.mubr.bf16.gmra.mrb[0].mxu0 %v1696
    %v1736 = vpop.f32.mrb[0].mxu0
    %v1737 = vadd.f32 %v1653, %v1736
    %v1738 = vpop.f32.mrb[0].mxu0
    %v1739 = vpop.f32.mrb[0].mxu0
    %v1740 = vpop.f32.mrb[0].mxu0
    %1741 = vdwg.mxu0
    %1742 = vmax.xlane.f32.xlu0 %v1737
    %v1743 = vpop.xlane.xlu0 %1742
    %v1744 = vsub.f32 %v1737, %v1743
    %v1745 = vmul.f32 %v1744, 1.442695
    %v1746 = vpow.pop %v1745
    %1747 = vadd.xlane.f32.xlu0 %v1746
    %v1748 = vpop.xlane.xlu0 %1747
    %v1749 = vrcp.pop %v1748
    %v1750 = vmul.f32 %v1748, %v1749
    %v1751 = vsub.f32 2.0, %v1750
    %v1752 = vmul.f32 %v1749, %v1751
    %v1753 = vmul.f32 %v1746, %v1752
    %1754 = vst [vmem:[#allocation2] sm:$0xff] %v1753
    // Predicated region
    $region30: #{mnist_fc_forward.1} parent=1 // pred_check
      _
    $region31: #{mnist_fc_forward.1} parent=1 // pred_check_branch
      %1756 = sbr.rel (0) target = $region33
    $region32: #{mnist_fc_forward.1} parent=1 // pred_region
      %s1758 = ssub.s32 128, 128
      %1759 = vsyncadd [#allocation3], %s1758
      %s1761 = sshll.u32 [#allocation2], 4
      %s1762 = int_to_ptr.vmem [resolvable:$true] %s1761
      %1764 = dma.vmem_to_hbm [thread:$0]  %s1762, 128, %s7, [#allocation3]
    $region33: #{mnist_fc_forward.1} parent=1 // pred_fallthru
      _
    // Predicated region
    $region34: #{mnist_fc_forward.1} parent=1 // pred_check
      _
    $region35: #{mnist_fc_forward.1} parent=1 // pred_check_branch
      %1766 = sbr.rel (0) target = $region37
    $region36: #{mnist_fc_forward.1} parent=1 // pred_region
      %1767 = dma.done [#allocation3], 128
    $region37: #{mnist_fc_forward.1} parent=1 // pred_fallthru
      _
    %1768 = vsyncpa [#allocation3], 1

</llo_original>
